<compile_context>
chip_gen: v7x
topology: tpu7x:2x2x1
jax: 0.10.0
libtpu: 0.0.40
codegen_flags: <defaults>
</compile_context>

<pallas_src>
import functools
import math

import jax
import jax.numpy as jnp
from jax.experimental import pallas as pl
from jax.experimental.pallas import tpu as pltpu


# Storage dtype for streamed operands in the tiled path (adj, S1, S2, H, HLR).
# MXU consumes bf16 directly on v5e/v6e/v7x; accumulation stays f32.
STREAM_DTYPE = jnp.bfloat16

BN_EPS = 1e-5
NEG_INF = -1e30
VMEM_LIMIT_BYTES = 48 * 1024 * 1024

# Fully-fused single-call path limits (everything must sit in VMEM at once).
FUSED_MAX_NPAD = 256
FUSED_MAX_FPAD = 512
FUSED_MAX_HPAD = 256


# ----------------------------------------------------------------------------
# Fused single-call kernel (small graphs)
# ----------------------------------------------------------------------------
def gcn_fused_kernel(x_ref, adj_ref, w1_ref, w2_ref, a_ref, whg_ref, o_ref,
                     *, n_real):
    f32 = jnp.float32
    adj = adj_ref[...]
    x = x_ref[...]

    def bn_relu(y):
        # Padded rows of y are exactly zero, so dividing by the real N is exact.
        mean = jnp.sum(y, axis=0, keepdims=True) / n_real
        var = jnp.maximum(
            jnp.sum(y * y, axis=0, keepdims=True) / n_real - mean * mean, 0.0)
        return jnp.maximum((y - mean) * jax.lax.rsqrt(var + BN_EPS), 0.0)

    # gc1 -> bn1 -> relu
    s1 = jnp.dot(x, w1_ref[...], preferred_element_type=f32)
    y1 = jnp.dot(adj, s1, preferred_element_type=f32)
    h1 = bn_relu(y1)
    # gc2 -> bn2 -> relu  (padded rows of s2 are killed by zero adj columns)
    s2 = jnp.dot(h1, w2_ref[...], preferred_element_type=f32)
    y2 = jnp.dot(adj, s2, preferred_element_type=f32)
    h = bn_relu(y2)
    row = jax.lax.broadcasted_iota(jnp.int32, h.shape, 0)
    h = jnp.where(row < n_real, h, 0.0)

    # Attention: S = (H W_l)(H W_r)^T = H (W_l W_r^T) H^T = HLR @ H^T
    hlr = jnp.dot(h, a_ref[...], preferred_element_type=f32)
    s = jax.lax.dot_general(hlr, h, dimension_numbers=(((1,), (1,)), ((), ())),
                            preferred_element_type=f32)
    col = jax.lax.broadcasted_iota(jnp.int32, s.shape, 1)
    s = jnp.where(col < n_real, s, NEG_INF)
    m = jnp.max(s, axis=-1, keepdims=True)
    p = jnp.exp(s - m)
    beta = p / jnp.sum(p, axis=-1, keepdims=True)
    b = jnp.dot(beta, h, preferred_element_type=f32)

    o_ref[...] = (jnp.dot(adj, h, preferred_element_type=f32)
                  + jnp.dot(b, whg_ref[...], preferred_element_type=f32))


# ----------------------------------------------------------------------------
# Tiled-pipeline kernels (large graphs)
# ----------------------------------------------------------------------------
def matmul_kernel(x_ref, w_ref, o_ref):
    """o = x @ w   (one row tile per grid step, weight resident)."""
    o_ref[...] = jnp.dot(x_ref[...], w_ref[...],
                         preferred_element_type=jnp.float32).astype(o_ref.dtype)


def spmm_stats_kernel(adj_ref, s_ref, y_ref, stats_ref, acc_ref):
    """Y[i] = sum_k adj[i,k] @ S[k]  +  per-row-tile BN partial stats.

    Grid = (row tiles, contraction tiles); contraction axis last, 'arbitrary';
    f32 accumulator in VMEM scratch.  stats[i,0] = column sums of Y[i],
    stats[i,1] = column sums of Y[i]^2.
    """
    k = pl.program_id(1)

    @pl.when(k == 0)
    def _():
        acc_ref[...] = jnp.zeros_like(acc_ref)

    acc_ref[...] += jnp.dot(adj_ref[...], s_ref[...],
                            preferred_element_type=jnp.float32)

    @pl.when(k == pl.num_programs(1) - 1)
    def _():
        y = acc_ref[...]
        y_ref[...] = y
        col_sum = jnp.sum(y, axis=0, keepdims=True)
        col_sq = jnp.sum(y * y, axis=0, keepdims=True)
        stats_ref[...] = jnp.concatenate([col_sum, col_sq], axis=0)[None]


def bn_relu_matmul_kernel(y_ref, scale_ref, shift_ref, w_ref, o_ref):
    """o = relu(y * scale + shift) @ w   (BN folded into scale/shift)."""
    h = jnp.maximum(y_ref[...] * scale_ref[...] + shift_ref[...], 0.0)
    o_ref[...] = jnp.dot(h, w_ref[...],
                         preferred_element_type=jnp.float32).astype(o_ref.dtype)


def bn_relu_hlr_kernel(y_ref, scale_ref, shift_ref, a_ref, h_ref, hlr_ref,
                       *, n_real, tile_m):
    """H = relu(y*scale+shift) (padded rows zeroed); HLR = H @ (W_l W_r^T).

    Fuses the BN/ReLU/mask pass with the HLR projection so H is produced and
    consumed in one pass (one HBM round-trip removed vs separate kernels).
    """
    h = jnp.maximum(y_ref[...] * scale_ref[...] + shift_ref[...], 0.0)
    row = (jax.lax.broadcasted_iota(jnp.int32, h.shape, 0)
           + pl.program_id(0) * tile_m)
    h = jnp.where(row < n_real, h, 0.0)
    h_ref[...] = h.astype(h_ref.dtype)
    hlr_ref[...] = jnp.dot(h, a_ref[...],
                           preferred_element_type=jnp.float32).astype(hlr_ref.dtype)


def attention_kernel(adj_ref, hlr_ref, h_ref, whg_ref, o_ref,
                     m_ref, l_ref, acc_ref, adjh_ref, *, n_real, tile_k):
    """Fused AttentionLayer for one query row tile.

    Online (flash-style) softmax over key tiles of S = HLR @ H^T, fused with
    the adj @ H accumulation over the same key tiles.  Final step:
      out = adj @ H + (softmax(S) @ H) @ W_hg   (gamma folded into W_hg).
    The HR stream is gone: A = W_l W_r^T was folded into HLR by the producer.
    """
    k = pl.program_id(1)

    @pl.when(k == 0)
    def _():
        m_ref[...] = jnp.full(m_ref.shape, NEG_INF, jnp.float32)
        l_ref[...] = jnp.zeros_like(l_ref)
        acc_ref[...] = jnp.zeros_like(acc_ref)
        adjh_ref[...] = jnp.zeros_like(adjh_ref)

    h = h_ref[...]

    # Fused graph aggregation: adj @ H for this row tile.
    adjh_ref[...] += jnp.dot(adj_ref[...], h, preferred_element_type=jnp.float32)

    # Scores in NT form (contract last dims) - no explicit transpose copy.
    s = jax.lax.dot_general(hlr_ref[...], h,
                            dimension_numbers=(((1,), (1,)), ((), ())),
                            preferred_element_type=jnp.float32)

    key_ids = jax.lax.broadcasted_iota(jnp.int32, s.shape, 1) + k * tile_k
    valid = key_ids < n_real
    s = jnp.where(valid, s, NEG_INF)

    m_prev = m_ref[...]
    m_new = jnp.maximum(m_prev, jnp.max(s, axis=-1, keepdims=True))
    alpha = jnp.exp(m_prev - m_new)
    p = jnp.exp(s - m_new) * valid.astype(jnp.float32)
    l_ref[...] = alpha * l_ref[...] + jnp.sum(p, axis=-1, keepdims=True)
    acc_ref[...] = alpha * acc_ref[...] + jnp.dot(
        p.astype(h.dtype), h, preferred_element_type=jnp.float32)
    m_ref[...] = m_new

    @pl.when(k == pl.num_programs(1) - 1)
    def _():
        b = acc_ref[...] / l_ref[...]     # exact normalization (no approx recip)
        o_ref[...] = (adjh_ref[...]
                      + jnp.dot(b, whg_ref[...], preferred_element_type=jnp.float32)
                      ).astype(o_ref.dtype)


# ----------------------------------------------------------------------------
# Wrapper
# ----------------------------------------------------------------------------
def _round_up(v, m):
    return ((v + m - 1) // m) * m


def _pad2d(a, rows, cols, dtype):
    r, c = a.shape
    return jnp.pad(a.astype(dtype), ((0, rows - r), (0, cols - c)))


def gcn_forward(x, adj, params, *, force_tiled=False):
    n, nfeat = x.shape
    nhid = params["w1"].shape[1]

    f_pad = _round_up(nfeat, 128)
    h_pad = _round_up(nhid, 128)
    n_pad = _round_up(n, 128)

    # Exact algebraic folds (delete the HR stream and the W_h/W_g chain).
    a_mat = jnp.dot(params["W_l"], params["W_r"].T)              # W_l @ W_r^T
    whg = params["gamma"][0] * jnp.dot(params["W_h"], params["W_g"])

    use_fused = (not force_tiled
                 and n_pad <= FUSED_MAX_NPAD
                 and f_pad <= FUSED_MAX_FPAD
                 and h_pad <= FUSED_MAX_HPAD)

    if use_fused:
        x_p = _pad2d(x, n_pad, f_pad, jnp.float32)
        adj_p = _pad2d(adj, n_pad, n_pad, jnp.float32)
        w1_p = _pad2d(params["w1"], f_pad, h_pad, jnp.float32)
        w2_p = _pad2d(params["w2"], h_pad, h_pad, jnp.float32)
        a_p = _pad2d(a_mat, h_pad, h_pad, jnp.float32)
        whg_p = _pad2d(whg, h_pad, h_pad, jnp.float32)

        kern = functools.partial(gcn_fused_kernel, n_real=n)
        out = pl.pallas_call(
            kern,
            out_shape=jax.ShapeDtypeStruct((n_pad, h_pad), jnp.float32),
            grid=(1,),
            in_specs=[pl.BlockSpec((n_pad, f_pad), lambda i: (0, 0)),
                      pl.BlockSpec((n_pad, n_pad), lambda i: (0, 0)),
                      pl.BlockSpec((f_pad, h_pad), lambda i: (0, 0)),
                      pl.BlockSpec((h_pad, h_pad), lambda i: (0, 0)),
                      pl.BlockSpec((h_pad, h_pad), lambda i: (0, 0)),
                      pl.BlockSpec((h_pad, h_pad), lambda i: (0, 0))],
            out_specs=pl.BlockSpec((n_pad, h_pad), lambda i: (0, 0)),
            compiler_params=pltpu.CompilerParams(
                dimension_semantics=("arbitrary",),
                vmem_limit_bytes=VMEM_LIMIT_BYTES),
        )(x_p, adj_p, w1_p, w2_p, a_p, whg_p)
        return out[:n, :nhid]

    # ---------------- tiled multi-kernel pipeline ----------------
    # Row/key/contraction tile: 256 when the padded node count allows it
    # (fills the 2x256 MXU on v6e/v7x, halves per-step overhead), else 128.
    tile = 256 if n_pad % 256 == 0 else 128
    num_i = n_pad // tile
    num_k = n_pad // tile

    x_p = _pad2d(x, n_pad, f_pad, jnp.float32)
    adj_p = _pad2d(adj, n_pad, n_pad, STREAM_DTYPE)      # bf16 adj stream
    w1_p = _pad2d(params["w1"], f_pad, h_pad, jnp.float32)
    w2_p = _pad2d(params["w2"], h_pad, h_pad, jnp.float32)
    a_p = _pad2d(a_mat, h_pad, h_pad, jnp.float32)
    whg_p = _pad2d(whg, h_pad, h_pad, jnp.float32)

    cp_rows = pltpu.CompilerParams(
        dimension_semantics=("parallel",),
        vmem_limit_bytes=VMEM_LIMIT_BYTES)
    cp_rows_contract = pltpu.CompilerParams(
        dimension_semantics=("parallel", "arbitrary"),
        vmem_limit_bytes=VMEM_LIMIT_BYTES)

    def mm(xp, wp):
        # NOTE: whole feature dim kept per row tile; fine for moderate nfeat.
        rows, fin = xp.shape
        fout = wp.shape[1]
        return pl.pallas_call(
            matmul_kernel,
            out_shape=jax.ShapeDtypeStruct((rows, fout), STREAM_DTYPE),
            grid=(rows // tile,),
            in_specs=[pl.BlockSpec((tile, fin), lambda i: (i, 0)),
                      pl.BlockSpec((fin, fout), lambda i: (0, 0))],
            out_specs=pl.BlockSpec((tile, fout), lambda i: (i, 0)),
            compiler_params=cp_rows,
        )(xp, wp)

    def spmm_stats(adj_pp, s_p):
        return pl.pallas_call(
            spmm_stats_kernel,
            out_shape=(jax.ShapeDtypeStruct((n_pad, h_pad), jnp.float32),
                       jax.ShapeDtypeStruct((num_i, 2, h_pad), jnp.float32)),
            grid=(num_i, num_k),
            in_specs=[pl.BlockSpec((tile, tile), lambda i, k: (i, k)),
                      pl.BlockSpec((tile, h_pad), lambda i, k: (k, 0))],
            out_specs=(pl.BlockSpec((tile, h_pad), lambda i, k: (i, 0)),
                       pl.BlockSpec((1, 2, h_pad), lambda i, k: (i, 0, 0))),
            scratch_shapes=[pltpu.VMEM((tile, h_pad), jnp.float32)],
            compiler_params=cp_rows_contract,
        )(adj_pp, s_p)

    def bn_affine(stats):
        # Cross-tile BN finalization from per-row-tile partial sums (padded
        # rows are exactly zero, so dividing by the real N is exact).
        col_sum = jnp.sum(stats[:, 0, :], axis=0)
        col_sq = jnp.sum(stats[:, 1, :], axis=0)
        mean = col_sum / n
        var = jnp.maximum(col_sq / n - mean * mean, 0.0)   # biased variance
        scale = jax.lax.rsqrt(var + BN_EPS)
        shift = -mean * scale
        return scale[None, :], shift[None, :]

    def bn_relu_mm(y_p, scale, shift, w_p):
        fout = w_p.shape[1]
        return pl.pallas_call(
            bn_relu_matmul_kernel,
            out_shape=jax.ShapeDtypeStruct((n_pad, fout), STREAM_DTYPE),
            grid=(num_i,),
            in_specs=[pl.BlockSpec((tile, h_pad), lambda i: (i, 0)),
                      pl.BlockSpec((1, h_pad), lambda i: (0, 0)),
                      pl.BlockSpec((1, h_pad), lambda i: (0, 0)),
                      pl.BlockSpec((h_pad, fout), lambda i: (0, 0))],
            out_specs=pl.BlockSpec((tile, fout), lambda i: (i, 0)),
            compiler_params=cp_rows,
        )(y_p, scale, shift, w_p)

    def bn_relu_hlr(y_p, scale, shift, a_pp):
        kern = functools.partial(bn_relu_hlr_kernel, n_real=n, tile_m=tile)
        return pl.pallas_call(
            kern,
            out_shape=(jax.ShapeDtypeStruct((n_pad, h_pad), STREAM_DTYPE),
                       jax.ShapeDtypeStruct((n_pad, h_pad), STREAM_DTYPE)),
            grid=(num_i,),
            in_specs=[pl.BlockSpec((tile, h_pad), lambda i: (i, 0)),
                      pl.BlockSpec((1, h_pad), lambda i: (0, 0)),
                      pl.BlockSpec((1, h_pad), lambda i: (0, 0)),
                      pl.BlockSpec((h_pad, h_pad), lambda i: (0, 0))],
            out_specs=(pl.BlockSpec((tile, h_pad), lambda i: (i, 0)),
                       pl.BlockSpec((tile, h_pad), lambda i: (i, 0))),
            compiler_params=cp_rows,
        )(y_p, scale, shift, a_pp)

    def attention(adj_pp, hlr, h_p, whg_pp):
        kern = functools.partial(attention_kernel, n_real=n, tile_k=tile)
        return pl.pallas_call(
            kern,
            out_shape=jax.ShapeDtypeStruct((n_pad, h_pad), jnp.float32),
            grid=(num_i, num_k),
            in_specs=[pl.BlockSpec((tile, tile), lambda i, k: (i, k)),    # adj
                      pl.BlockSpec((tile, h_pad), lambda i, k: (i, 0)),   # HLR
                      pl.BlockSpec((tile, h_pad), lambda i, k: (k, 0)),   # H
                      pl.BlockSpec((h_pad, h_pad), lambda i, k: (0, 0))], # W_hg
            out_specs=pl.BlockSpec((tile, h_pad), lambda i, k: (i, 0)),
            scratch_shapes=[pltpu.VMEM((tile, 1), jnp.float32),      # running max
                            pltpu.VMEM((tile, 1), jnp.float32),      # running sum
                            pltpu.VMEM((tile, h_pad), jnp.float32),  # softmax acc
                            pltpu.VMEM((tile, h_pad), jnp.float32)], # adj @ H acc
            compiler_params=cp_rows_contract,
        )(adj_pp, hlr, h_p, whg_pp)

    # ---- pipeline ----
    s1 = mm(x_p, w1_p)                        # X @ W1                  (bf16)
    y1, st1 = spmm_stats(adj_p, s1)           # adj @ S1 + BN1 stats
    sc1, sh1 = bn_affine(st1)
    s2 = bn_relu_mm(y1, sc1, sh1, w2_p)       # relu(bn1(Y1)) @ W2      (bf16)
    y2, st2 = spmm_stats(adj_p, s2)           # adj @ S2 + BN2 stats
    sc2, sh2 = bn_affine(st2)
    h, hlr = bn_relu_hlr(y2, sc2, sh2, a_p)   # H and H @ (W_l W_r^T)   (bf16)
    out = attention(adj_p, hlr, h, whg_p)     # adj@H + softmax(HLR H^T)@H@W_hg

    return out[:n, :nhid]


# ----------------------------------------------------------------------------
# Parameter init (matches the PyTorch module's reset_parameters)
# ----------------------------------------------------------------------------
def init_params(key, nfeat, nhid):
    ks = jax.random.split(key, 6)

    # GraphConvolution: uniform(-stdv, stdv), stdv = 1/sqrt(out_features)
    stdv = 1.0 / math.sqrt(nhid)
    w1 = jax.random.uniform(ks[0], (nfeat, nhid), jnp.float32, -stdv, stdv)
    w2 = jax.random.uniform(ks[1], (nhid, nhid), jnp.float32, -stdv, stdv)

    # AttentionLayer: xavier_uniform on (nhid, nhid) -> bound = sqrt(6/(2*nhid))
    bound = math.sqrt(6.0 / (2.0 * nhid))
    W_l = jax.random.uniform(ks[2], (nhid, nhid), jnp.float32, -bound, bound)
    W_r = jax.random.uniform(ks[3], (nhid, nhid), jnp.float32, -bound, bound)
    W_h = jax.random.uniform(ks[4], (nhid, nhid), jnp.float32, -bound, bound)
    W_g = jax.random.uniform(ks[5], (nhid, nhid), jnp.float32, -bound, bound)

    gamma = jnp.zeros((1,), jnp.float32)  # nn.Parameter(torch.FloatTensor([0]))

    return dict(w1=w1, w2=w2, W_l=W_l, W_r=W_r, W_h=W_h, W_g=W_g, gamma=gamma)


# Plain-JAX reference of the PyTorch forward (training-mode BatchNorm).
def gcn_reference(x, adj, params):
    hi = jax.lax.Precision.HIGHEST

    def mmh(a, b):
        return jnp.dot(a, b, precision=hi)

    def bn(y):
        mean = jnp.mean(y, axis=0, keepdims=True)
        var = jnp.mean((y - mean) ** 2, axis=0, keepdims=True)
        return (y - mean) / jnp.sqrt(var + BN_EPS)

    h = jnp.maximum(bn(mmh(adj, mmh(x, params["w1"]))), 0.0)
    h = jnp.maximum(bn(mmh(adj, mmh(h, params["w2"]))), 0.0)
    hl = mmh(h, params["W_l"])
    hr = mmh(h, params["W_r"])
    beta = jax.nn.softmax(mmh(hl, hr.T), axis=-1)
    o = mmh(mmh(mmh(beta, h), params["W_h"]), params["W_g"])
    return mmh(adj, h) + params["gamma"][0] * o


if __name__ == "__main__":
    N, nfeat, nhid = 8, 16, 32

    key = jax.random.PRNGKey(0)
    k_x, k_adj, k_p = jax.random.split(key, 3)

    x = jax.random.normal(k_x, (N, nfeat), jnp.float32)

    # symmetric row-normalized adjacency with self loops (deterministic)
    a = (jax.random.uniform(k_adj, (N, N)) > 0.6).astype(jnp.float32)
    a = jnp.maximum(a, a.T) + jnp.eye(N, dtype=jnp.float32)
    adj = a / jnp.sum(a, axis=1, keepdims=True)

    params = init_params(k_p, nfeat, nhid)
    # Use a nonzero gamma so the attention/softmax branch is actually exercised
    # (the module initializes gamma=0, which would zero that branch out).
    params = dict(params, gamma=jnp.array([0.5], jnp.float32))

    ref = gcn_reference(x, adj, params)
    scale = float(jnp.max(jnp.abs(ref))) + 1e-6

    # Small graph -> single fused Pallas kernel (all-f32).
    out_fused = jax.jit(gcn_forward)(x, adj, params)
    jax.block_until_ready(out_fused)
    assert out_fused.shape == (N, nhid)
    assert bool(jnp.all(jnp.isfinite(out_fused)))
    err_f = float(jnp.max(jnp.abs(out_fused - ref)))
    assert err_f <= 5e-2 * scale + 1e-3, f"fused path mismatch: {err_f}"

    # Tiled multi-kernel path (bf16-streamed) on the same problem.
    fwd_tiled = jax.jit(functools.partial(gcn_forward, force_tiled=True))
    out_tiled = fwd_tiled(x, adj, params)
    jax.block_until_ready(out_tiled)
    err_t = float(jnp.max(jnp.abs(out_tiled - ref)))
    assert err_t <= 1.5e-1 * scale + 1e-2, f"tiled path mismatch: {err_t}"

    # Larger graph exercising the multi-tile grid (n_pad=384 -> 3x3 tiles).
    N2 = 300
    x2 = jax.random.normal(jax.random.PRNGKey(1), (N2, nfeat), jnp.float32)
    a2 = (jax.random.uniform(jax.random.PRNGKey(2), (N2, N2)) > 0.98
          ).astype(jnp.float32)
    a2 = jnp.maximum(a2, a2.T) + jnp.eye(N2, dtype=jnp.float32)
    adj2 = a2 / jnp.sum(a2, axis=1, keepdims=True)
    out2 = fwd_tiled(x2, adj2, params)
    jax.block_until_ready(out2)
    assert out2.shape == (N2, nhid)
    assert bool(jnp.all(jnp.isfinite(out2)))

    print("KERNEL_OK")
</pallas_src>

<mosaic_0001>
module attributes {stable_mosaic.version = 11 : i64} {
  func.func @gcn_fused_kernel(%arg0: i32, %arg1: memref<128x128xf32, #tpu.memory_space<vmem>>, %arg2: memref<128x128xf32, #tpu.memory_space<vmem>>, %arg3: memref<128x128xf32, #tpu.memory_space<vmem>>, %arg4: memref<128x128xf32, #tpu.memory_space<vmem>>, %arg5: memref<128x128xf32, #tpu.memory_space<vmem>>, %arg6: memref<128x128xf32, #tpu.memory_space<vmem>>, %arg7: memref<128x128xf32, #tpu.memory_space<vmem>>) attributes {dimension_semantics = [#tpu.dimension_semantics<arbitrary>], iteration_bounds = array<i64: 1>, scalar_prefetch = 0 : i64, scratch_operands = 0 : i64, tpu.core_type = #tpu.core_type<tc>, window_params = [{pipeline_mode = #tpu.pipeline_mode<synchronous>, transform_indices = @transform_0, window_bounds = array<i64: 128, 128>}, {pipeline_mode = #tpu.pipeline_mode<synchronous>, transform_indices = @transform_1, window_bounds = array<i64: 128, 128>}, {pipeline_mode = #tpu.pipeline_mode<synchronous>, transform_indices = @transform_2, window_bounds = array<i64: 128, 128>}, {pipeline_mode = #tpu.pipeline_mode<synchronous>, transform_indices = @transform_3, window_bounds = array<i64: 128, 128>}, {pipeline_mode = #tpu.pipeline_mode<synchronous>, transform_indices = @transform_4, window_bounds = array<i64: 128, 128>}, {pipeline_mode = #tpu.pipeline_mode<synchronous>, transform_indices = @transform_5, window_bounds = array<i64: 128, 128>}, {pipeline_mode = #tpu.pipeline_mode<synchronous>, transform_indices = @transform_6, window_bounds = array<i64: 128, 128>}]} {
    %c0 = arith.constant 0 : index
    %c0_0 = arith.constant 0 : index
    %0 = vector.load %arg2[%c0, %c0_0] : memref<128x128xf32, #tpu.memory_space<vmem>>, vector<128x128xf32>
    %c0_1 = arith.constant 0 : index
    %c0_2 = arith.constant 0 : index
    %1 = vector.load %arg1[%c0_1, %c0_2] : memref<128x128xf32, #tpu.memory_space<vmem>>, vector<128x128xf32>
    %c0_3 = arith.constant 0 : index
    %c0_4 = arith.constant 0 : index
    %2 = vector.load %arg3[%c0_3, %c0_4] : memref<128x128xf32, #tpu.memory_space<vmem>>, vector<128x128xf32>
    %cst = arith.constant dense<0.000000e+00> : vector<128x128xf32>
    %3 = tpu.matmul %1, %2, %cst {dimension_numbers = #tpu.dot_dimension_numbers<[1], [0], [0], [1], [0, 0, 1, 1], [], []>} : vector<128x128xf32>, vector<128x128xf32>, vector<128x128xf32> -> vector<128x128xf32>
    %cst_5 = arith.constant dense<0.000000e+00> : vector<128x128xf32>
    %4 = tpu.matmul %0, %3, %cst_5 {dimension_numbers = #tpu.dot_dimension_numbers<[1], [0], [0], [1], [0, 0, 1, 1], [], []>} : vector<128x128xf32>, vector<128x128xf32>, vector<128x128xf32> -> vector<128x128xf32>
    %cst_6 = arith.constant dense<0.000000e+00> : vector<128xf32>
    %5 = vector.multi_reduction <add>, %4, %cst_6 [0] : vector<128x128xf32> to vector<128xf32>
    %6 = vector.shape_cast %5 : vector<128xf32> to vector<1x128xf32>
    %cst_7 = arith.constant 8.000000e+00 : f32
    %7 = vector.broadcast %cst_7 : f32 to vector<1x128xf32>
    %8 = arith.divf %6, %7 : vector<1x128xf32>
    %9 = arith.mulf %4, %4 : vector<128x128xf32>
    %cst_8 = arith.constant dense<0.000000e+00> : vector<128xf32>
    %10 = vector.multi_reduction <add>, %9, %cst_8 [0] : vector<128x128xf32> to vector<128xf32>
    %11 = vector.shape_cast %10 : vector<128xf32> to vector<1x128xf32>
    %cst_9 = arith.constant 8.000000e+00 : f32
    %12 = vector.broadcast %cst_9 : f32 to vector<1x128xf32>
    %13 = arith.divf %11, %12 : vector<1x128xf32>
    %14 = arith.mulf %8, %8 : vector<1x128xf32>
    %15 = arith.subf %13, %14 : vector<1x128xf32>
    %cst_10 = arith.constant 0.000000e+00 : f32
    %16 = vector.broadcast %cst_10 : f32 to vector<1x128xf32>
    %17 = arith.maximumf %15, %16 : vector<1x128xf32>
    %18 = vector.broadcast %8 : vector<1x128xf32> to vector<128x128xf32>
    %19 = arith.subf %4, %18 : vector<128x128xf32>
    %cst_11 = arith.constant 9.99999974E-6 : f32
    %20 = vector.broadcast %cst_11 : f32 to vector<1x128xf32>
    %21 = arith.addf %17, %20 : vector<1x128xf32>
    %22 = math.rsqrt %21 : vector<1x128xf32>
    %23 = vector.broadcast %22 : vector<1x128xf32> to vector<128x128xf32>
    %24 = arith.mulf %19, %23 : vector<128x128xf32>
    %cst_12 = arith.constant 0.000000e+00 : f32
    %25 = vector.broadcast %cst_12 : f32 to vector<128x128xf32>
    %26 = arith.maximumf %24, %25 : vector<128x128xf32>
    %c0_13 = arith.constant 0 : index
    %c0_14 = arith.constant 0 : index
    %27 = vector.load %arg4[%c0_13, %c0_14] : memref<128x128xf32, #tpu.memory_space<vmem>>, vector<128x128xf32>
    %cst_15 = arith.constant dense<0.000000e+00> : vector<128x128xf32>
    %28 = tpu.matmul %26, %27, %cst_15 {dimension_numbers = #tpu.dot_dimension_numbers<[1], [0], [0], [1], [0, 0, 1, 1], [], []>} : vector<128x128xf32>, vector<128x128xf32>, vector<128x128xf32> -> vector<128x128xf32>
    %cst_16 = arith.constant dense<0.000000e+00> : vector<128x128xf32>
    %29 = tpu.matmul %0, %28, %cst_16 {dimension_numbers = #tpu.dot_dimension_numbers<[1], [0], [0], [1], [0, 0, 1, 1], [], []>} : vector<128x128xf32>, vector<128x128xf32>, vector<128x128xf32> -> vector<128x128xf32>
    %cst_17 = arith.constant dense<0.000000e+00> : vector<128xf32>
    %30 = vector.multi_reduction <add>, %29, %cst_17 [0] : vector<128x128xf32> to vector<128xf32>
    %31 = vector.shape_cast %30 : vector<128xf32> to vector<1x128xf32>
    %cst_18 = arith.constant 8.000000e+00 : f32
    %32 = vector.broadcast %cst_18 : f32 to vector<1x128xf32>
    %33 = arith.divf %31, %32 : vector<1x128xf32>
    %34 = arith.mulf %29, %29 : vector<128x128xf32>
    %cst_19 = arith.constant dense<0.000000e+00> : vector<128xf32>
    %35 = vector.multi_reduction <add>, %34, %cst_19 [0] : vector<128x128xf32> to vector<128xf32>
    %36 = vector.shape_cast %35 : vector<128xf32> to vector<1x128xf32>
    %cst_20 = arith.constant 8.000000e+00 : f32
    %37 = vector.broadcast %cst_20 : f32 to vector<1x128xf32>
    %38 = arith.divf %36, %37 : vector<1x128xf32>
    %39 = arith.mulf %33, %33 : vector<1x128xf32>
    %40 = arith.subf %38, %39 : vector<1x128xf32>
    %cst_21 = arith.constant 0.000000e+00 : f32
    %41 = vector.broadcast %cst_21 : f32 to vector<1x128xf32>
    %42 = arith.maximumf %40, %41 : vector<1x128xf32>
    %43 = vector.broadcast %33 : vector<1x128xf32> to vector<128x128xf32>
    %44 = arith.subf %29, %43 : vector<128x128xf32>
    %cst_22 = arith.constant 9.99999974E-6 : f32
    %45 = vector.broadcast %cst_22 : f32 to vector<1x128xf32>
    %46 = arith.addf %42, %45 : vector<1x128xf32>
    %47 = math.rsqrt %46 : vector<1x128xf32>
    %48 = vector.broadcast %47 : vector<1x128xf32> to vector<128x128xf32>
    %49 = arith.mulf %44, %48 : vector<128x128xf32>
    %cst_23 = arith.constant 0.000000e+00 : f32
    %50 = vector.broadcast %cst_23 : f32 to vector<128x128xf32>
    %51 = arith.maximumf %49, %50 : vector<128x128xf32>
    %52 = tpu.iota {dimensions = array<i32: 0>} : vector<128x128xi32>
    %c8_i32 = arith.constant 8 : i32
    %53 = vector.broadcast %c8_i32 : i32 to vector<128x128xi32>
    %54 = arith.cmpi slt, %52, %53 : vector<128x128xi32>
    %cst_24 = arith.constant 0.000000e+00 : f32
    %55 = vector.broadcast %cst_24 : f32 to vector<128x128xf32>
    %56 = arith.select %54, %51, %55 : vector<128x128xi1>, vector<128x128xf32>
    %c0_25 = arith.constant 0 : index
    %c0_26 = arith.constant 0 : index
    %57 = vector.load %arg5[%c0_25, %c0_26] : memref<128x128xf32, #tpu.memory_space<vmem>>, vector<128x128xf32>
    %cst_27 = arith.constant dense<0.000000e+00> : vector<128x128xf32>
    %58 = tpu.matmul %56, %57, %cst_27 {dimension_numbers = #tpu.dot_dimension_numbers<[1], [0], [0], [1], [0, 0, 1, 1], [], []>} : vector<128x128xf32>, vector<128x128xf32>, vector<128x128xf32> -> vector<128x128xf32>
    %cst_28 = arith.constant dense<0.000000e+00> : vector<128x128xf32>
    %59 = tpu.matmul %58, %56, %cst_28 {dimension_numbers = #tpu.dot_dimension_numbers<[1], [1], [0], [0], [0, 0, 1, 0], [], []>} : vector<128x128xf32>, vector<128x128xf32>, vector<128x128xf32> -> vector<128x128xf32>
    %60 = tpu.iota {dimensions = array<i32: 1>} : vector<128x128xi32>
    %c8_i32_29 = arith.constant 8 : i32
    %61 = vector.broadcast %c8_i32_29 : i32 to vector<128x128xi32>
    %62 = arith.cmpi slt, %60, %61 : vector<128x128xi32>
    %cst_30 = arith.constant -1.000000e+30 : f32
    %63 = vector.broadcast %cst_30 : f32 to vector<128x128xf32>
    %64 = arith.select %62, %59, %63 : vector<128x128xi1>, vector<128x128xf32>
    %cst_31 = arith.constant dense<0xFF800000> : vector<128xf32>
    %65 = vector.multi_reduction <maximumf>, %64, %cst_31 [1] : vector<128x128xf32> to vector<128xf32>
    %66 = vector.shape_cast %65 : vector<128xf32> to vector<128x1xf32>
    %67 = vector.broadcast %66 : vector<128x1xf32> to vector<128x128xf32>
    %68 = arith.subf %64, %67 : vector<128x128xf32>
    %69 = math.exp %68 : vector<128x128xf32>
    %cst_32 = arith.constant dense<0.000000e+00> : vector<128xf32>
    %70 = vector.multi_reduction <add>, %69, %cst_32 [1] : vector<128x128xf32> to vector<128xf32>
    %71 = vector.shape_cast %70 : vector<128xf32> to vector<128x1xf32>
    %72 = vector.broadcast %71 : vector<128x1xf32> to vector<128x128xf32>
    %73 = arith.divf %69, %72 : vector<128x128xf32>
    %cst_33 = arith.constant dense<0.000000e+00> : vector<128x128xf32>
    %74 = tpu.matmul %73, %56, %cst_33 {dimension_numbers = #tpu.dot_dimension_numbers<[1], [0], [0], [1], [0, 0, 1, 1], [], []>} : vector<128x128xf32>, vector<128x128xf32>, vector<128x128xf32> -> vector<128x128xf32>
    %cst_34 = arith.constant dense<0.000000e+00> : vector<128x128xf32>
    %75 = tpu.matmul %0, %56, %cst_34 {dimension_numbers = #tpu.dot_dimension_numbers<[1], [0], [0], [1], [0, 0, 1, 1], [], []>} : vector<128x128xf32>, vector<128x128xf32>, vector<128x128xf32> -> vector<128x128xf32>
    %c0_35 = arith.constant 0 : index
    %c0_36 = arith.constant 0 : index
    %76 = vector.load %arg6[%c0_35, %c0_36] : memref<128x128xf32, #tpu.memory_space<vmem>>, vector<128x128xf32>
    %cst_37 = arith.constant dense<0.000000e+00> : vector<128x128xf32>
    %77 = tpu.matmul %74, %76, %cst_37 {dimension_numbers = #tpu.dot_dimension_numbers<[1], [0], [0], [1], [0, 0, 1, 1], [], []>} : vector<128x128xf32>, vector<128x128xf32>, vector<128x128xf32> -> vector<128x128xf32>
    %78 = arith.addf %75, %77 : vector<128x128xf32>
    %c0_38 = arith.constant 0 : index
    %c0_39 = arith.constant 0 : index
    %79 = vector.load %arg7[%c0_38, %c0_39] : memref<128x128xf32, #tpu.memory_space<vmem>>, vector<128x128xf32>
    tpu.vector_store %arg7[%c0_38, %c0_39], %78 {strides = array<i32>} : memref<128x128xf32, #tpu.memory_space<vmem>>, vector<128x128xf32>,
    return
  }
  func.func @transform_0(%arg0: i32) -> (i32, i32) {
    %c0_i32 = arith.constant 0 : i32
    %c0_i32_0 = arith.constant 0 : i32
    %c0_i32_1 = arith.constant 0 : i32
    return %c0_i32, %c0_i32_0 : i32, i32
  }
  func.func @transform_1(%arg0: i32) -> (i32, i32) {
    %c0_i32 = arith.constant 0 : i32
    %c0_i32_0 = arith.constant 0 : i32
    %c0_i32_1 = arith.constant 0 : i32
    return %c0_i32, %c0_i32_0 : i32, i32
  }
  func.func @transform_2(%arg0: i32) -> (i32, i32) {
    %c0_i32 = arith.constant 0 : i32
    %c0_i32_0 = arith.constant 0 : i32
    %c0_i32_1 = arith.constant 0 : i32
    return %c0_i32, %c0_i32_0 : i32, i32
  }
  func.func @transform_3(%arg0: i32) -> (i32, i32) {
    %c0_i32 = arith.constant 0 : i32
    %c0_i32_0 = arith.constant 0 : i32
    %c0_i32_1 = arith.constant 0 : i32
    return %c0_i32, %c0_i32_0 : i32, i32
  }
  func.func @transform_4(%arg0: i32) -> (i32, i32) {
    %c0_i32 = arith.constant 0 : i32
    %c0_i32_0 = arith.constant 0 : i32
    %c0_i32_1 = arith.constant 0 : i32
    return %c0_i32, %c0_i32_0 : i32, i32
  }
  func.func @transform_5(%arg0: i32) -> (i32, i32) {
    %c0_i32 = arith.constant 0 : i32
    %c0_i32_0 = arith.constant 0 : i32
    %c0_i32_1 = arith.constant 0 : i32
    return %c0_i32, %c0_i32_0 : i32, i32
  }
  func.func @transform_6(%arg0: i32) -> (i32, i32) {
    %c0_i32 = arith.constant 0 : i32
    %c0_i32_0 = arith.constant 0 : i32
    %c0_i32_1 = arith.constant 0 : i32
    return %c0_i32, %c0_i32_0 : i32, i32
  }
}

</mosaic_0001>

<llo_original>
// kernel: gcn_forward.1
$region0: #{gcn_forward.1}
  #allocation0 [shape = 'u32[]', space=smem, size = 0x4, offset = 0x4, fixed_abs, tag = 'smem constant byte address 0x4 - core index']
  #allocation1 [shape = 'u32[144,128]{1,0:T(1,128)}', space=vmem, size = 0x12000, scoped, tag = 'internal scratch']
  %s0 = inlined_call_operand.vmem [shape: f32[128,128], index: 0, kind: input, shape index: {}]
  %s1 = inlined_call_operand.vmem [shape: f32[128,128], index: 1, kind: input, shape index: {}]
  %s2 = inlined_call_operand.vmem [shape: f32[128,128], index: 2, kind: input, shape index: {}]
  %s3 = inlined_call_operand.vmem [shape: f32[128,128], index: 3, kind: input, shape index: {}]
  %s4 = inlined_call_operand.vmem [shape: f32[128,128], index: 4, kind: input, shape index: {}]
  %s5 = inlined_call_operand.vmem [shape: f32[128,128], index: 5, kind: input, shape index: {}]
  %s6 = inlined_call_operand.vmem [shape: f32[128,128], index: 6, kind: output, shape index: {}]
  %s7 = sld [smem:[#allocation0]]
  $region34: #{gcn_forward.1} parent=0
    _
  %s9 = ssub.s32 1, %s7
  %s10 = scalar_select 0, %s9, %s7
  // Predicated region
  $region2: #{gcn_forward.1} parent=0 // pred_check
    _
  $region3: #{gcn_forward.1} parent=0 // pred_check_branch
    %12 = sbr.rel (0) target = $region5
  $region4: #{gcn_forward.1} parent=0 // pred_region
    _
  $region5: #{gcn_forward.1} parent=0 // pred_fallthru
    _
  // Predicated region
  $region6: #{gcn_forward.1} parent=0 // pred_check
    _
  $region7: #{gcn_forward.1} parent=0 // pred_check_branch
    %14 = sbr.rel (0) target = $region9
  $region8: #{gcn_forward.1} parent=0 // pred_region
    _
  $region9: #{gcn_forward.1} parent=0 // pred_fallthru
    _
  // Predicated region
  $region10: #{gcn_forward.1} parent=0 // pred_check
    _
  $region11: #{gcn_forward.1} parent=0 // pred_check_branch
    %16 = sbr.rel (0) target = $region13
  $region12: #{gcn_forward.1} parent=0 // pred_region
    _
  $region13: #{gcn_forward.1} parent=0 // pred_fallthru
    _
  // Predicated region
  $region14: #{gcn_forward.1} parent=0 // pred_check
    _
  $region15: #{gcn_forward.1} parent=0 // pred_check_branch
    %18 = sbr.rel (0) target = $region17
  $region16: #{gcn_forward.1} parent=0 // pred_region
    _
  $region17: #{gcn_forward.1} parent=0 // pred_fallthru
    _
  // Predicated region
  $region18: #{gcn_forward.1} parent=0 // pred_check
    _
  $region19: #{gcn_forward.1} parent=0 // pred_check_branch
    %20 = sbr.rel (0) target = $region21
  $region20: #{gcn_forward.1} parent=0 // pred_region
    _
  $region21: #{gcn_forward.1} parent=0 // pred_fallthru
    _
  // Predicated region
  $region22: #{gcn_forward.1} parent=0 // pred_check
    _
  $region23: #{gcn_forward.1} parent=0 // pred_check_branch
    %22 = sbr.rel (0) target = $region25
  $region24: #{gcn_forward.1} parent=0 // pred_region
    _
  $region25: #{gcn_forward.1} parent=0 // pred_fallthru
    _
  %v23 = vld [vmem:[%s1] sm:$0xff]
  %v24 = vld [vmem:[%s1 + $0x8] sm:$0xff]
  %v25 = vld [vmem:[%s1 + $0x10] sm:$0xff]
  %v26 = vld [vmem:[%s1 + $0x18] sm:$0xff]
  %v27 = vld [vmem:[%s1 + $0x20] sm:$0xff]
  %v28 = vld [vmem:[%s1 + $0x28] sm:$0xff]
  %v29 = vld [vmem:[%s1 + $0x30] sm:$0xff]
  %v30 = vld [vmem:[%s1 + $0x38] sm:$0xff]
  %v31 = vld [vmem:[%s1 + $0x40] sm:$0xff]
  %v32 = vld [vmem:[%s1 + $0x48] sm:$0xff]
  %v33 = vld [vmem:[%s1 + $0x50] sm:$0xff]
  %v34 = vld [vmem:[%s1 + $0x58] sm:$0xff]
  %v35 = vld [vmem:[%s1 + $0x60] sm:$0xff]
  %v36 = vld [vmem:[%s1 + $0x68] sm:$0xff]
  %v37 = vld [vmem:[%s1 + $0x70] sm:$0xff]
  %v38 = vld [vmem:[%s1 + $0x78] sm:$0xff]
  %v39 = vld [vmem:[%s0] sm:$0xff]
  %v40 = vld [vmem:[%s0 + $0x8] sm:$0xff]
  %v41 = vld [vmem:[%s0 + $0x10] sm:$0xff]
  %v42 = vld [vmem:[%s0 + $0x18] sm:$0xff]
  %v43 = vld [vmem:[%s0 + $0x20] sm:$0xff]
  %v44 = vld [vmem:[%s0 + $0x28] sm:$0xff]
  %v45 = vld [vmem:[%s0 + $0x30] sm:$0xff]
  %v46 = vld [vmem:[%s0 + $0x38] sm:$0xff]
  %v47 = vld [vmem:[%s0 + $0x40] sm:$0xff]
  %v48 = vld [vmem:[%s0 + $0x48] sm:$0xff]
  %v49 = vld [vmem:[%s0 + $0x50] sm:$0xff]
  %v50 = vld [vmem:[%s0 + $0x58] sm:$0xff]
  %v51 = vld [vmem:[%s0 + $0x60] sm:$0xff]
  %v52 = vld [vmem:[%s0 + $0x68] sm:$0xff]
  %v53 = vld [vmem:[%s0 + $0x70] sm:$0xff]
  %v54 = vld [vmem:[%s0 + $0x78] sm:$0xff]
  %v55 = vld [vmem:[%s2] sm:$0xff]
  %v56 = vld [vmem:[%s2 + $0x8] sm:$0xff]
  %v57 = vld [vmem:[%s2 + $0x10] sm:$0xff]
  %v58 = vld [vmem:[%s2 + $0x18] sm:$0xff]
  %v59 = vld [vmem:[%s2 + $0x20] sm:$0xff]
  %v60 = vld [vmem:[%s2 + $0x28] sm:$0xff]
  %v61 = vld [vmem:[%s2 + $0x30] sm:$0xff]
  %v62 = vld [vmem:[%s2 + $0x38] sm:$0xff]
  %v63 = vld [vmem:[%s2 + $0x40] sm:$0xff]
  %v64 = vld [vmem:[%s2 + $0x48] sm:$0xff]
  %v65 = vld [vmem:[%s2 + $0x50] sm:$0xff]
  %v66 = vld [vmem:[%s2 + $0x58] sm:$0xff]
  %v67 = vld [vmem:[%s2 + $0x60] sm:$0xff]
  %v68 = vld [vmem:[%s2 + $0x68] sm:$0xff]
  %v69 = vld [vmem:[%s2 + $0x70] sm:$0xff]
  %v70 = vld [vmem:[%s2 + $0x78] sm:$0xff]
  %71 = vmatprep.subr.mxu0 0.0
  %72 = vmatpush1.msra.mxu0 %v55
  %73 = vmatprep.subr.mxu0 0.0
  %74 = vmatpush1.msra.mxu0 %v56
  %75 = vmatprep.subr.mxu0 0.0
  %76 = vmatpush1.msra.mxu0 %v57
  %77 = vmatprep.subr.mxu0 0.0
  %78 = vmatpush1.msra.mxu0 %v58
  %79 = vmatprep.subr.mxu0 0.0
  %80 = vmatpush1.msra.mxu0 %v59
  %81 = vmatprep.subr.mxu0 0.0
  %82 = vmatpush1.msra.mxu0 %v60
  %83 = vmatprep.subr.mxu0 0.0
  %84 = vmatpush1.msra.mxu0 %v61
  %85 = vmatprep.subr.mxu0 0.0
  %86 = vmatpush1.msra.mxu0 %v62
  %87 = vmatprep.subr.mxu0 0.0
  %88 = vmatpush1.msra.mxu0 %v63
  %89 = vmatprep.subr.mxu0 0.0
  %90 = vmatpush1.msra.mxu0 %v64
  %91 = vmatprep.subr.mxu0 0.0
  %92 = vmatpush1.msra.mxu0 %v65
  %93 = vmatprep.subr.mxu0 0.0
  %94 = vmatpush1.msra.mxu0 %v66
  %95 = vmatprep.subr.mxu0 0.0
  %96 = vmatpush1.msra.mxu0 %v67
  %97 = vmatprep.subr.mxu0 0.0
  %98 = vmatpush1.msra.mxu0 %v68
  %99 = vmatprep.subr.mxu0 0.0
  %100 = vmatpush1.msra.mxu0 %v69
  %101 = vmatprep.subr.mxu0 0.0
  %102 = vmatpush1.msra.mxu0 %v70
  %103 = vmatprep.subr.mxu0 0.0
  %104 = vmatpush1.msra.mxu0 0.0
  %105 = vmatprep.subr.mxu0 0.0
  %106 = vmatpush1.msra.mxu0 0.0
  %107 = vmatprep.subr.mxu0 0.0
  %108 = vmatpush1.msra.mxu0 0.0
  %109 = vmatprep.subr.mxu0 0.0
  %110 = vmatpush1.msra.mxu0 0.0
  %111 = vmatprep.subr.mxu0 0.0
  %112 = vmatpush1.msra.mxu0 0.0
  %113 = vmatprep.subr.mxu0 0.0
  %114 = vmatpush1.msra.mxu0 0.0
  %115 = vmatprep.subr.mxu0 0.0
  %116 = vmatpush1.msra.mxu0 0.0
  %117 = vmatprep.subr.mxu0 0.0
  %118 = vmatpush1.msra.mxu0 0.0
  %119 = vmatprep.subr.mxu0 0.0
  %120 = vmatpush1.msra.mxu0 0.0
  %121 = vmatprep.subr.mxu0 0.0
  %122 = vmatpush1.msra.mxu0 0.0
  %123 = vmatprep.subr.mxu0 0.0
  %124 = vmatpush1.msra.mxu0 0.0
  %125 = vmatprep.subr.mxu0 0.0
  %126 = vmatpush1.msra.mxu0 0.0
  %127 = vmatprep.subr.mxu0 0.0
  %128 = vmatpush1.msra.mxu0 0.0
  %129 = vmatprep.subr.mxu0 0.0
  %130 = vmatpush1.msra.mxu0 0.0
  %131 = vmatprep.subr.mxu0 0.0
  %132 = vmatpush1.msra.mxu0 0.0
  %133 = vmatprep.subr.mxu0 0.0
  %134 = vmatpush1.msra.mxu0 0.0
  %135 = vmatprep.mubr.f32.mxu0 0.0
  %136 = vmatmul.mubr.f32.gmra.mrb[0].mxu0 %v39
  %v137 = vpop.f32.mrb[0].mxu0
  %v138 = vadd.f32 0.0, %v137
  %v139 = vpop.f32.mrb[0].mxu0
  %140 = vmatprep.mubr.f32.mxu0 0.0
  %141 = vmatmul.mubr.f32.gmra.mrb[0].mxu0 %v40
  %v142 = vpop.f32.mrb[0].mxu0
  %v143 = vadd.f32 0.0, %v142
  %v144 = vpop.f32.mrb[0].mxu0
  %145 = vmatprep.mubr.f32.mxu0 0.0
  %146 = vmatmul.mubr.f32.gmra.mrb[0].mxu0 %v41
  %v147 = vpop.f32.mrb[0].mxu0
  %v148 = vadd.f32 0.0, %v147
  %v149 = vpop.f32.mrb[0].mxu0
  %150 = vmatprep.mubr.f32.mxu0 0.0
  %151 = vmatmul.mubr.f32.gmra.mrb[0].mxu0 %v42
  %v152 = vpop.f32.mrb[0].mxu0
  %v153 = vadd.f32 0.0, %v152
  %v154 = vpop.f32.mrb[0].mxu0
  %155 = vmatprep.mubr.f32.mxu0 0.0
  %156 = vmatmul.mubr.f32.gmra.mrb[0].mxu0 %v43
  %v157 = vpop.f32.mrb[0].mxu0
  %v158 = vadd.f32 0.0, %v157
  %v159 = vpop.f32.mrb[0].mxu0
  %160 = vmatprep.mubr.f32.mxu0 0.0
  %161 = vmatmul.mubr.f32.gmra.mrb[0].mxu0 %v44
  %v162 = vpop.f32.mrb[0].mxu0
  %v163 = vadd.f32 0.0, %v162
  %v164 = vpop.f32.mrb[0].mxu0
  %165 = vmatprep.mubr.f32.mxu0 0.0
  %166 = vmatmul.mubr.f32.gmra.mrb[0].mxu0 %v45
  %v167 = vpop.f32.mrb[0].mxu0
  %v168 = vadd.f32 0.0, %v167
  %v169 = vpop.f32.mrb[0].mxu0
  %170 = vmatprep.mubr.f32.mxu0 0.0
  %171 = vmatmul.mubr.f32.gmra.mrb[0].mxu0 %v46
  %v172 = vpop.f32.mrb[0].mxu0
  %v173 = vadd.f32 0.0, %v172
  %v174 = vpop.f32.mrb[0].mxu0
  %175 = vmatprep.mubr.f32.mxu0 0.0
  %176 = vmatmul.mubr.f32.gmra.mrb[0].mxu0 %v47
  %v177 = vpop.f32.mrb[0].mxu0
  %v178 = vadd.f32 0.0, %v177
  %v179 = vpop.f32.mrb[0].mxu0
  %180 = vmatprep.mubr.f32.mxu0 0.0
  %181 = vmatmul.mubr.f32.gmra.mrb[0].mxu0 %v48
  %v182 = vpop.f32.mrb[0].mxu0
  %v183 = vadd.f32 0.0, %v182
  %v184 = vpop.f32.mrb[0].mxu0
  %185 = vmatprep.mubr.f32.mxu0 0.0
  %186 = vmatmul.mubr.f32.gmra.mrb[0].mxu0 %v49
  %v187 = vpop.f32.mrb[0].mxu0
  %v188 = vadd.f32 0.0, %v187
  %v189 = vpop.f32.mrb[0].mxu0
  %190 = vmatprep.mubr.f32.mxu0 0.0
  %191 = vmatmul.mubr.f32.gmra.mrb[0].mxu0 %v50
  %v192 = vpop.f32.mrb[0].mxu0
  %v193 = vadd.f32 0.0, %v192
  %v194 = vpop.f32.mrb[0].mxu0
  %195 = vmatprep.mubr.f32.mxu0 0.0
  %196 = vmatmul.mubr.f32.gmra.mrb[0].mxu0 %v51
  %v197 = vpop.f32.mrb[0].mxu0
  %v198 = vadd.f32 0.0, %v197
  %v199 = vpop.f32.mrb[0].mxu0
  %200 = vmatprep.mubr.f32.mxu0 0.0
  %201 = vmatmul.mubr.f32.gmra.mrb[0].mxu0 %v52
  %v202 = vpop.f32.mrb[0].mxu0
  %v203 = vadd.f32 0.0, %v202
  %v204 = vpop.f32.mrb[0].mxu0
  %205 = vmatprep.mubr.f32.mxu0 0.0
  %206 = vmatmul.mubr.f32.gmra.mrb[0].mxu0 %v53
  %v207 = vpop.f32.mrb[0].mxu0
  %v208 = vadd.f32 0.0, %v207
  %v209 = vpop.f32.mrb[0].mxu0
  %210 = vmatprep.mubr.f32.mxu0 0.0
  %211 = vmatmul.mubr.f32.gmra.mrb[0].mxu0 %v54
  %v212 = vpop.f32.mrb[0].mxu0
  %v213 = vadd.f32 0.0, %v212
  %v214 = vpop.f32.mrb[0].mxu0
  %215 = vdwg.mxu0
  %216 = vmatprep.subr.mxu0 0.0
  %217 = vmatpush1.msra.mxu0 %v138
  %218 = vmatprep.subr.mxu0 0.0
  %219 = vmatpush1.msra.mxu0 %v143
  %220 = vmatprep.subr.mxu0 0.0
  %221 = vmatpush1.msra.mxu0 %v148
  %222 = vmatprep.subr.mxu0 0.0
  %223 = vmatpush1.msra.mxu0 %v153
  %224 = vmatprep.subr.mxu0 0.0
  %225 = vmatpush1.msra.mxu0 %v158
  %226 = vmatprep.subr.mxu0 0.0
  %227 = vmatpush1.msra.mxu0 %v163
  %228 = vmatprep.subr.mxu0 0.0
  %229 = vmatpush1.msra.mxu0 %v168
  %230 = vmatprep.subr.mxu0 0.0
  %231 = vmatpush1.msra.mxu0 %v173
  %232 = vmatprep.subr.mxu0 0.0
  %233 = vmatpush1.msra.mxu0 %v178
  %234 = vmatprep.subr.mxu0 0.0
  %235 = vmatpush1.msra.mxu0 %v183
  %236 = vmatprep.subr.mxu0 0.0
  %237 = vmatpush1.msra.mxu0 %v188
  %238 = vmatprep.subr.mxu0 0.0
  %239 = vmatpush1.msra.mxu0 %v193
  %240 = vmatprep.subr.mxu0 0.0
  %241 = vmatpush1.msra.mxu0 %v198
  %242 = vmatprep.subr.mxu0 0.0
  %243 = vmatpush1.msra.mxu0 %v203
  %244 = vmatprep.subr.mxu0 0.0
  %245 = vmatpush1.msra.mxu0 %v208
  %246 = vmatprep.subr.mxu0 0.0
  %247 = vmatpush1.msra.mxu0 %v213
  %248 = vmatprep.subr.mxu0 0.0
  %249 = vmatpush1.msra.mxu0 0.0
  %250 = vmatprep.subr.mxu0 0.0
  %251 = vmatpush1.msra.mxu0 0.0
  %252 = vmatprep.subr.mxu0 0.0
  %253 = vmatpush1.msra.mxu0 0.0
  %254 = vmatprep.subr.mxu0 0.0
  %255 = vmatpush1.msra.mxu0 0.0
  %256 = vmatprep.subr.mxu0 0.0
  %257 = vmatpush1.msra.mxu0 0.0
  %258 = vmatprep.subr.mxu0 0.0
  %259 = vmatpush1.msra.mxu0 0.0
  %260 = vmatprep.subr.mxu0 0.0
  %261 = vmatpush1.msra.mxu0 0.0
  %262 = vmatprep.subr.mxu0 0.0
  %263 = vmatpush1.msra.mxu0 0.0
  %264 = vmatprep.subr.mxu0 0.0
  %265 = vmatpush1.msra.mxu0 0.0
  %266 = vmatprep.subr.mxu0 0.0
  %267 = vmatpush1.msra.mxu0 0.0
  %268 = vmatprep.subr.mxu0 0.0
  %269 = vmatpush1.msra.mxu0 0.0
  %270 = vmatprep.subr.mxu0 0.0
  %271 = vmatpush1.msra.mxu0 0.0
  %272 = vmatprep.subr.mxu0 0.0
  %273 = vmatpush1.msra.mxu0 0.0
  %274 = vmatprep.subr.mxu0 0.0
  %275 = vmatpush1.msra.mxu0 0.0
  %276 = vmatprep.subr.mxu0 0.0
  %277 = vmatpush1.msra.mxu0 0.0
  %278 = vmatprep.subr.mxu0 0.0
  %279 = vmatpush1.msra.mxu0 0.0
  %280 = vmatprep.mubr.f32.mxu0 0.0
  %281 = vmatmul.mubr.f32.gmra.mrb[0].mxu0 %v23
  %v282 = vpop.f32.mrb[0].mxu0
  %v283 = vadd.f32 0.0, %v282
  %v284 = vpop.f32.mrb[0].mxu0
  %285 = vmatprep.mubr.f32.mxu0 0.0
  %286 = vmatmul.mubr.f32.gmra.mrb[0].mxu0 %v24
  %v287 = vpop.f32.mrb[0].mxu0
  %v288 = vadd.f32 0.0, %v287
  %v289 = vpop.f32.mrb[0].mxu0
  %290 = vmatprep.mubr.f32.mxu0 0.0
  %291 = vmatmul.mubr.f32.gmra.mrb[0].mxu0 %v25
  %v292 = vpop.f32.mrb[0].mxu0
  %v293 = vadd.f32 0.0, %v292
  %v294 = vpop.f32.mrb[0].mxu0
  %295 = vmatprep.mubr.f32.mxu0 0.0
  %296 = vmatmul.mubr.f32.gmra.mrb[0].mxu0 %v26
  %v297 = vpop.f32.mrb[0].mxu0
  %v298 = vadd.f32 0.0, %v297
  %v299 = vpop.f32.mrb[0].mxu0
  %300 = vmatprep.mubr.f32.mxu0 0.0
  %301 = vmatmul.mubr.f32.gmra.mrb[0].mxu0 %v27
  %v302 = vpop.f32.mrb[0].mxu0
  %v303 = vadd.f32 0.0, %v302
  %v304 = vpop.f32.mrb[0].mxu0
  %305 = vmatprep.mubr.f32.mxu0 0.0
  %306 = vmatmul.mubr.f32.gmra.mrb[0].mxu0 %v28
  %v307 = vpop.f32.mrb[0].mxu0
  %v308 = vadd.f32 0.0, %v307
  %v309 = vpop.f32.mrb[0].mxu0
  %310 = vmatprep.mubr.f32.mxu0 0.0
  %311 = vmatmul.mubr.f32.gmra.mrb[0].mxu0 %v29
  %v312 = vpop.f32.mrb[0].mxu0
  %v313 = vadd.f32 0.0, %v312
  %v314 = vpop.f32.mrb[0].mxu0
  %315 = vmatprep.mubr.f32.mxu0 0.0
  %316 = vmatmul.mubr.f32.gmra.mrb[0].mxu0 %v30
  %v317 = vpop.f32.mrb[0].mxu0
  %v318 = vadd.f32 0.0, %v317
  %v319 = vpop.f32.mrb[0].mxu0
  %320 = vmatprep.mubr.f32.mxu0 0.0
  %321 = vmatmul.mubr.f32.gmra.mrb[0].mxu0 %v31
  %v322 = vpop.f32.mrb[0].mxu0
  %v323 = vadd.f32 0.0, %v322
  %v324 = vpop.f32.mrb[0].mxu0
  %325 = vmatprep.mubr.f32.mxu0 0.0
  %326 = vmatmul.mubr.f32.gmra.mrb[0].mxu0 %v32
  %v327 = vpop.f32.mrb[0].mxu0
  %v328 = vadd.f32 0.0, %v327
  %v329 = vpop.f32.mrb[0].mxu0
  %330 = vmatprep.mubr.f32.mxu0 0.0
  %331 = vmatmul.mubr.f32.gmra.mrb[0].mxu0 %v33
  %v332 = vpop.f32.mrb[0].mxu0
  %v333 = vadd.f32 0.0, %v332
  %v334 = vpop.f32.mrb[0].mxu0
  %335 = vmatprep.mubr.f32.mxu0 0.0
  %336 = vmatmul.mubr.f32.gmra.mrb[0].mxu0 %v34
  %v337 = vpop.f32.mrb[0].mxu0
  %v338 = vadd.f32 0.0, %v337
  %v339 = vpop.f32.mrb[0].mxu0
  %340 = vmatprep.mubr.f32.mxu0 0.0
  %341 = vmatmul.mubr.f32.gmra.mrb[0].mxu0 %v35
  %v342 = vpop.f32.mrb[0].mxu0
  %v343 = vadd.f32 0.0, %v342
  %v344 = vpop.f32.mrb[0].mxu0
  %345 = vmatprep.mubr.f32.mxu0 0.0
  %346 = vmatmul.mubr.f32.gmra.mrb[0].mxu0 %v36
  %v347 = vpop.f32.mrb[0].mxu0
  %v348 = vadd.f32 0.0, %v347
  %v349 = vpop.f32.mrb[0].mxu0
  %350 = vmatprep.mubr.f32.mxu0 0.0
  %351 = vmatmul.mubr.f32.gmra.mrb[0].mxu0 %v37
  %v352 = vpop.f32.mrb[0].mxu0
  %v353 = vadd.f32 0.0, %v352
  %v354 = vpop.f32.mrb[0].mxu0
  %355 = vmatprep.mubr.f32.mxu0 0.0
  %356 = vmatmul.mubr.f32.gmra.mrb[0].mxu0 %v38
  %v357 = vpop.f32.mrb[0].mxu0
  %v358 = vadd.f32 0.0, %v357
  %v359 = vpop.f32.mrb[0].mxu0
  %360 = vdwg.mxu0
  %v361 = vadd.f32 %v283, %v288
  %v362 = vadd.f32 %v361, %v293
  %v363 = vadd.f32 %v362, %v298
  %v364 = vadd.f32 %v363, %v303
  %v365 = vadd.f32 %v364, %v308
  %v366 = vadd.f32 %v365, %v313
  %v367 = vadd.f32 %v366, %v318
  %v368 = vadd.f32 %v367, %v323
  %v369 = vadd.f32 %v368, %v328
  %v370 = vadd.f32 %v369, %v333
  %v371 = vadd.f32 %v370, %v338
  %v372 = vadd.f32 %v371, %v343
  %v373 = vadd.f32 %v372, %v348
  %v374 = vadd.f32 %v373, %v353
  %v375 = vadd.f32 %v374, %v358
  %v376 = vrot.slane %v375, 4
  %v377 = vadd.f32 %v375, %v376
  %v378 = vrot.slane %v377, 2
  %v379 = vadd.f32 %v377, %v378
  %v380 = vrot.slane %v379, 1
  %v381 = vadd.f32 %v379, %v380
  %v382 = vrcp.pop 8.0
  %v383 = vmul.f32 %v381, %v382
  %v384 = vmul.f32 %v283, %v283
  %v385 = vmul.f32 %v288, %v288
  %v386 = vmul.f32 %v293, %v293
  %v387 = vmul.f32 %v298, %v298
  %v388 = vmul.f32 %v303, %v303
  %v389 = vmul.f32 %v308, %v308
  %v390 = vmul.f32 %v313, %v313
  %v391 = vmul.f32 %v318, %v318
  %v392 = vmul.f32 %v323, %v323
  %v393 = vmul.f32 %v328, %v328
  %v394 = vmul.f32 %v333, %v333
  %v395 = vmul.f32 %v338, %v338
  %v396 = vmul.f32 %v343, %v343
  %v397 = vmul.f32 %v348, %v348
  %v398 = vmul.f32 %v353, %v353
  %v399 = vmul.f32 %v358, %v358
  %v400 = vadd.f32 %v384, %v385
  %v401 = vadd.f32 %v400, %v386
  %v402 = vadd.f32 %v401, %v387
  %v403 = vadd.f32 %v402, %v388
  %v404 = vadd.f32 %v403, %v389
  %v405 = vadd.f32 %v404, %v390
  %v406 = vadd.f32 %v405, %v391
  %v407 = vadd.f32 %v406, %v392
  %v408 = vadd.f32 %v407, %v393
  %v409 = vadd.f32 %v408, %v394
  %v410 = vadd.f32 %v409, %v395
  %v411 = vadd.f32 %v410, %v396
  %v412 = vadd.f32 %v411, %v397
  %v413 = vadd.f32 %v412, %v398
  %v414 = vadd.f32 %v413, %v399
  %v415 = vrot.slane %v414, 4
  %v416 = vadd.f32 %v414, %v415
  %v417 = vrot.slane %v416, 2
  %v418 = vadd.f32 %v416, %v417
  %v419 = vrot.slane %v418, 1
  %v420 = vadd.f32 %v418, %v419
  %v421 = vmul.f32 %v420, %v382
  %v422 = vmul.f32 %v383, %v383
  %v423 = vsub.f32 %v421, %v422
  %v424 = vmax.f32 %v423, 0.0
  %v425 = vsub.f32 %v283, %v383
  %v426 = vsub.f32 %v288, %v383
  %v427 = vsub.f32 %v293, %v383
  %v428 = vsub.f32 %v298, %v383
  %v429 = vsub.f32 %v303, %v383
  %v430 = vsub.f32 %v308, %v383
  %v431 = vsub.f32 %v313, %v383
  %v432 = vsub.f32 %v318, %v383
  %v433 = vsub.f32 %v323, %v383
  %v434 = vsub.f32 %v328, %v383
  %v435 = vsub.f32 %v333, %v383
  %v436 = vsub.f32 %v338, %v383
  %v437 = vsub.f32 %v343, %v383
  %v438 = vsub.f32 %v348, %v383
  %v439 = vsub.f32 %v353, %v383
  %v440 = vsub.f32 %v358, %v383
  %v441 = vadd.f32 %v424, 1e-05
  %v442 = vrsqrt.pop %v441
  %v443 = vmul.f32 %v425, %v442
  %v444 = vmul.f32 %v426, %v442
  %v445 = vmul.f32 %v427, %v442
  %v446 = vmul.f32 %v428, %v442
  %v447 = vmul.f32 %v429, %v442
  %v448 = vmul.f32 %v430, %v442
  %v449 = vmul.f32 %v431, %v442
  %v450 = vmul.f32 %v432, %v442
  %v451 = vmul.f32 %v433, %v442
  %v452 = vmul.f32 %v434, %v442
  %v453 = vmul.f32 %v435, %v442
  %v454 = vmul.f32 %v436, %v442
  %v455 = vmul.f32 %v437, %v442
  %v456 = vmul.f32 %v438, %v442
  %v457 = vmul.f32 %v439, %v442
  %v458 = vmul.f32 %v440, %v442
  %v459 = vmax.f32 %v443, 0.0
  %v460 = vmax.f32 %v444, 0.0
  %v461 = vmax.f32 %v445, 0.0
  %v462 = vmax.f32 %v446, 0.0
  %v463 = vmax.f32 %v447, 0.0
  %v464 = vmax.f32 %v448, 0.0
  %v465 = vmax.f32 %v449, 0.0
  %v466 = vmax.f32 %v450, 0.0
  %v467 = vmax.f32 %v451, 0.0
  %v468 = vmax.f32 %v452, 0.0
  %v469 = vmax.f32 %v453, 0.0
  %v470 = vmax.f32 %v454, 0.0
  %v471 = vmax.f32 %v455, 0.0
  %v472 = vmax.f32 %v456, 0.0
  %v473 = vmax.f32 %v457, 0.0
  %v474 = vmax.f32 %v458, 0.0
  %v475 = vld [vmem:[%s3] sm:$0xff]
  %v476 = vld [vmem:[%s3 + $0x8] sm:$0xff]
  %v477 = vld [vmem:[%s3 + $0x10] sm:$0xff]
  %v478 = vld [vmem:[%s3 + $0x18] sm:$0xff]
  %v479 = vld [vmem:[%s3 + $0x20] sm:$0xff]
  %v480 = vld [vmem:[%s3 + $0x28] sm:$0xff]
  %v481 = vld [vmem:[%s3 + $0x30] sm:$0xff]
  %v482 = vld [vmem:[%s3 + $0x38] sm:$0xff]
  %v483 = vld [vmem:[%s3 + $0x40] sm:$0xff]
  %v484 = vld [vmem:[%s3 + $0x48] sm:$0xff]
  %v485 = vld [vmem:[%s3 + $0x50] sm:$0xff]
  %v486 = vld [vmem:[%s3 + $0x58] sm:$0xff]
  %v487 = vld [vmem:[%s3 + $0x60] sm:$0xff]
  %v488 = vld [vmem:[%s3 + $0x68] sm:$0xff]
  %v489 = vld [vmem:[%s3 + $0x70] sm:$0xff]
  %v490 = vld [vmem:[%s3 + $0x78] sm:$0xff]
  %491 = vmatprep.subr.mxu0 0.0
  %492 = vmatpush1.msra.mxu0 %v475
  %493 = vmatprep.subr.mxu0 0.0
  %494 = vmatpush1.msra.mxu0 %v476
  %495 = vmatprep.subr.mxu0 0.0
  %496 = vmatpush1.msra.mxu0 %v477
  %497 = vmatprep.subr.mxu0 0.0
  %498 = vmatpush1.msra.mxu0 %v478
  %499 = vmatprep.subr.mxu0 0.0
  %500 = vmatpush1.msra.mxu0 %v479
  %501 = vmatprep.subr.mxu0 0.0
  %502 = vmatpush1.msra.mxu0 %v480
  %503 = vmatprep.subr.mxu0 0.0
  %504 = vmatpush1.msra.mxu0 %v481
  %505 = vmatprep.subr.mxu0 0.0
  %506 = vmatpush1.msra.mxu0 %v482
  %507 = vmatprep.subr.mxu0 0.0
  %508 = vmatpush1.msra.mxu0 %v483
  %509 = vmatprep.subr.mxu0 0.0
  %510 = vmatpush1.msra.mxu0 %v484
  %511 = vmatprep.subr.mxu0 0.0
  %512 = vmatpush1.msra.mxu0 %v485
  %513 = vmatprep.subr.mxu0 0.0
  %514 = vmatpush1.msra.mxu0 %v486
  %515 = vmatprep.subr.mxu0 0.0
  %516 = vmatpush1.msra.mxu0 %v487
  %517 = vmatprep.subr.mxu0 0.0
  %518 = vmatpush1.msra.mxu0 %v488
  %519 = vmatprep.subr.mxu0 0.0
  %520 = vmatpush1.msra.mxu0 %v489
  %521 = vmatprep.subr.mxu0 0.0
  %522 = vmatpush1.msra.mxu0 %v490
  %523 = vmatprep.subr.mxu0 0.0
  %524 = vmatpush1.msra.mxu0 0.0
  %525 = vmatprep.subr.mxu0 0.0
  %526 = vmatpush1.msra.mxu0 0.0
  %527 = vmatprep.subr.mxu0 0.0
  %528 = vmatpush1.msra.mxu0 0.0
  %529 = vmatprep.subr.mxu0 0.0
  %530 = vmatpush1.msra.mxu0 0.0
  %531 = vmatprep.subr.mxu0 0.0
  %532 = vmatpush1.msra.mxu0 0.0
  %533 = vmatprep.subr.mxu0 0.0
  %534 = vmatpush1.msra.mxu0 0.0
  %535 = vmatprep.subr.mxu0 0.0
  %536 = vmatpush1.msra.mxu0 0.0
  %537 = vmatprep.subr.mxu0 0.0
  %538 = vmatpush1.msra.mxu0 0.0
  %539 = vmatprep.subr.mxu0 0.0
  %540 = vmatpush1.msra.mxu0 0.0
  %541 = vmatprep.subr.mxu0 0.0
  %542 = vmatpush1.msra.mxu0 0.0
  %543 = vmatprep.subr.mxu0 0.0
  %544 = vmatpush1.msra.mxu0 0.0
  %545 = vmatprep.subr.mxu0 0.0
  %546 = vmatpush1.msra.mxu0 0.0
  %547 = vmatprep.subr.mxu0 0.0
  %548 = vmatpush1.msra.mxu0 0.0
  %549 = vmatprep.subr.mxu0 0.0
  %550 = vmatpush1.msra.mxu0 0.0
  %551 = vmatprep.subr.mxu0 0.0
  %552 = vmatpush1.msra.mxu0 0.0
  %553 = vmatprep.subr.mxu0 0.0
  %554 = vmatpush1.msra.mxu0 0.0
  %555 = vmatprep.mubr.f32.mxu0 0.0
  %556 = vmatmul.mubr.f32.gmra.mrb[0].mxu0 %v459
  %v557 = vpop.f32.mrb[0].mxu0
  %v558 = vadd.f32 0.0, %v557
  %v559 = vpop.f32.mrb[0].mxu0
  %560 = vmatprep.mubr.f32.mxu0 0.0
  %561 = vmatmul.mubr.f32.gmra.mrb[0].mxu0 %v460
  %v562 = vpop.f32.mrb[0].mxu0
  %v563 = vadd.f32 0.0, %v562
  %v564 = vpop.f32.mrb[0].mxu0
  %565 = vmatprep.mubr.f32.mxu0 0.0
  %566 = vmatmul.mubr.f32.gmra.mrb[0].mxu0 %v461
  %v567 = vpop.f32.mrb[0].mxu0
  %v568 = vadd.f32 0.0, %v567
  %v569 = vpop.f32.mrb[0].mxu0
  %570 = vmatprep.mubr.f32.mxu0 0.0
  %571 = vmatmul.mubr.f32.gmra.mrb[0].mxu0 %v462
  %v572 = vpop.f32.mrb[0].mxu0
  %v573 = vadd.f32 0.0, %v572
  %v574 = vpop.f32.mrb[0].mxu0
  %575 = vmatprep.mubr.f32.mxu0 0.0
  %576 = vmatmul.mubr.f32.gmra.mrb[0].mxu0 %v463
  %v577 = vpop.f32.mrb[0].mxu0
  %v578 = vadd.f32 0.0, %v577
  %v579 = vpop.f32.mrb[0].mxu0
  %580 = vmatprep.mubr.f32.mxu0 0.0
  %581 = vmatmul.mubr.f32.gmra.mrb[0].mxu0 %v464
  %v582 = vpop.f32.mrb[0].mxu0
  %v583 = vadd.f32 0.0, %v582
  %v584 = vpop.f32.mrb[0].mxu0
  %585 = vmatprep.mubr.f32.mxu0 0.0
  %586 = vmatmul.mubr.f32.gmra.mrb[0].mxu0 %v465
  %v587 = vpop.f32.mrb[0].mxu0
  %v588 = vadd.f32 0.0, %v587
  %v589 = vpop.f32.mrb[0].mxu0
  %590 = vmatprep.mubr.f32.mxu0 0.0
  %591 = vmatmul.mubr.f32.gmra.mrb[0].mxu0 %v466
  %v592 = vpop.f32.mrb[0].mxu0
  %v593 = vadd.f32 0.0, %v592
  %v594 = vpop.f32.mrb[0].mxu0
  %595 = vmatprep.mubr.f32.mxu0 0.0
  %596 = vmatmul.mubr.f32.gmra.mrb[0].mxu0 %v467
  %v597 = vpop.f32.mrb[0].mxu0
  %v598 = vadd.f32 0.0, %v597
  %v599 = vpop.f32.mrb[0].mxu0
  %600 = vmatprep.mubr.f32.mxu0 0.0
  %601 = vmatmul.mubr.f32.gmra.mrb[0].mxu0 %v468
  %v602 = vpop.f32.mrb[0].mxu0
  %v603 = vadd.f32 0.0, %v602
  %v604 = vpop.f32.mrb[0].mxu0
  %605 = vmatprep.mubr.f32.mxu0 0.0
  %606 = vmatmul.mubr.f32.gmra.mrb[0].mxu0 %v469
  %v607 = vpop.f32.mrb[0].mxu0
  %v608 = vadd.f32 0.0, %v607
  %v609 = vpop.f32.mrb[0].mxu0
  %610 = vmatprep.mubr.f32.mxu0 0.0
  %611 = vmatmul.mubr.f32.gmra.mrb[0].mxu0 %v470
  %v612 = vpop.f32.mrb[0].mxu0
  %v613 = vadd.f32 0.0, %v612
  %v614 = vpop.f32.mrb[0].mxu0
  %615 = vmatprep.mubr.f32.mxu0 0.0
  %616 = vmatmul.mubr.f32.gmra.mrb[0].mxu0 %v471
  %v617 = vpop.f32.mrb[0].mxu0
  %v618 = vadd.f32 0.0, %v617
  %v619 = vpop.f32.mrb[0].mxu0
  %620 = vmatprep.mubr.f32.mxu0 0.0
  %621 = vmatmul.mubr.f32.gmra.mrb[0].mxu0 %v472
  %v622 = vpop.f32.mrb[0].mxu0
  %v623 = vadd.f32 0.0, %v622
  %v624 = vpop.f32.mrb[0].mxu0
  %625 = vmatprep.mubr.f32.mxu0 0.0
  %626 = vmatmul.mubr.f32.gmra.mrb[0].mxu0 %v473
  %v627 = vpop.f32.mrb[0].mxu0
  %v628 = vadd.f32 0.0, %v627
  %v629 = vpop.f32.mrb[0].mxu0
  %630 = vmatprep.mubr.f32.mxu0 0.0
  %631 = vmatmul.mubr.f32.gmra.mrb[0].mxu0 %v474
  %v632 = vpop.f32.mrb[0].mxu0
  %v633 = vadd.f32 0.0, %v632
  %v634 = vpop.f32.mrb[0].mxu0
  %635 = vdwg.mxu0
  %636 = vmatprep.subr.mxu0 0.0
  %637 = vmatpush1.msra.mxu0 %v558
  %638 = vmatprep.subr.mxu0 0.0
  %639 = vmatpush1.msra.mxu0 %v563
  %640 = vmatprep.subr.mxu0 0.0
  %641 = vmatpush1.msra.mxu0 %v568
  %642 = vmatprep.subr.mxu0 0.0
  %643 = vmatpush1.msra.mxu0 %v573
  %644 = vmatprep.subr.mxu0 0.0
  %645 = vmatpush1.msra.mxu0 %v578
  %646 = vmatprep.subr.mxu0 0.0
  %647 = vmatpush1.msra.mxu0 %v583
  %648 = vmatprep.subr.mxu0 0.0
  %649 = vmatpush1.msra.mxu0 %v588
  %650 = vmatprep.subr.mxu0 0.0
  %651 = vmatpush1.msra.mxu0 %v593
  %652 = vmatprep.subr.mxu0 0.0
  %653 = vmatpush1.msra.mxu0 %v598
  %654 = vmatprep.subr.mxu0 0.0
  %655 = vmatpush1.msra.mxu0 %v603
  %656 = vmatprep.subr.mxu0 0.0
  %657 = vmatpush1.msra.mxu0 %v608
  %658 = vmatprep.subr.mxu0 0.0
  %659 = vmatpush1.msra.mxu0 %v613
  %660 = vmatprep.subr.mxu0 0.0
  %661 = vmatpush1.msra.mxu0 %v618
  %662 = vmatprep.subr.mxu0 0.0
  %663 = vmatpush1.msra.mxu0 %v623
  %664 = vmatprep.subr.mxu0 0.0
  %665 = vmatpush1.msra.mxu0 %v628
  %666 = vmatprep.subr.mxu0 0.0
  %667 = vmatpush1.msra.mxu0 %v633
  %668 = vmatprep.subr.mxu0 0.0
  %669 = vmatpush1.msra.mxu0 0.0
  %670 = vmatprep.subr.mxu0 0.0
  %671 = vmatpush1.msra.mxu0 0.0
  %672 = vmatprep.subr.mxu0 0.0
  %673 = vmatpush1.msra.mxu0 0.0
  %674 = vmatprep.subr.mxu0 0.0
  %675 = vmatpush1.msra.mxu0 0.0
  %676 = vmatprep.subr.mxu0 0.0
  %677 = vmatpush1.msra.mxu0 0.0
  %678 = vmatprep.subr.mxu0 0.0
  %679 = vmatpush1.msra.mxu0 0.0
  %680 = vmatprep.subr.mxu0 0.0
  %681 = vmatpush1.msra.mxu0 0.0
  %682 = vmatprep.subr.mxu0 0.0
  %683 = vmatpush1.msra.mxu0 0.0
  %684 = vmatprep.subr.mxu0 0.0
  %685 = vmatpush1.msra.mxu0 0.0
  %686 = vmatprep.subr.mxu0 0.0
  %687 = vmatpush1.msra.mxu0 0.0
  %688 = vmatprep.subr.mxu0 0.0
  %689 = vmatpush1.msra.mxu0 0.0
  %690 = vmatprep.subr.mxu0 0.0
  %691 = vmatpush1.msra.mxu0 0.0
  %692 = vmatprep.subr.mxu0 0.0
  %693 = vmatpush1.msra.mxu0 0.0
  %694 = vmatprep.subr.mxu0 0.0
  %695 = vmatpush1.msra.mxu0 0.0
  %696 = vmatprep.subr.mxu0 0.0
  %697 = vmatpush1.msra.mxu0 0.0
  %698 = vmatprep.subr.mxu0 0.0
  %699 = vmatpush1.msra.mxu0 0.0
  %700 = vmatprep.mubr.f32.mxu0 0.0
  %701 = vmatmul.mubr.f32.gmra.mrb[0].mxu0 %v23
  %v702 = vpop.f32.mrb[0].mxu0
  %v703 = vadd.f32 0.0, %v702
  %v704 = vpop.f32.mrb[0].mxu0
  %705 = vmatprep.mubr.f32.mxu0 0.0
  %706 = vmatmul.mubr.f32.gmra.mrb[0].mxu0 %v24
  %v707 = vpop.f32.mrb[0].mxu0
  %v708 = vadd.f32 0.0, %v707
  %v709 = vpop.f32.mrb[0].mxu0
  %710 = vmatprep.mubr.f32.mxu0 0.0
  %711 = vmatmul.mubr.f32.gmra.mrb[0].mxu0 %v25
  %v712 = vpop.f32.mrb[0].mxu0
  %v713 = vadd.f32 0.0, %v712
  %v714 = vpop.f32.mrb[0].mxu0
  %715 = vmatprep.mubr.f32.mxu0 0.0
  %716 = vmatmul.mubr.f32.gmra.mrb[0].mxu0 %v26
  %v717 = vpop.f32.mrb[0].mxu0
  %v718 = vadd.f32 0.0, %v717
  %v719 = vpop.f32.mrb[0].mxu0
  %720 = vmatprep.mubr.f32.mxu0 0.0
  %721 = vmatmul.mubr.f32.gmra.mrb[0].mxu0 %v27
  %v722 = vpop.f32.mrb[0].mxu0
  %v723 = vadd.f32 0.0, %v722
  %v724 = vpop.f32.mrb[0].mxu0
  %725 = vmatprep.mubr.f32.mxu0 0.0
  %726 = vmatmul.mubr.f32.gmra.mrb[0].mxu0 %v28
  %v727 = vpop.f32.mrb[0].mxu0
  %v728 = vadd.f32 0.0, %v727
  %v729 = vpop.f32.mrb[0].mxu0
  %730 = vmatprep.mubr.f32.mxu0 0.0
  %731 = vmatmul.mubr.f32.gmra.mrb[0].mxu0 %v29
  %v732 = vpop.f32.mrb[0].mxu0
  %v733 = vadd.f32 0.0, %v732
  %v734 = vpop.f32.mrb[0].mxu0
  %735 = vmatprep.mubr.f32.mxu0 0.0
  %736 = vmatmul.mubr.f32.gmra.mrb[0].mxu0 %v30
  %v737 = vpop.f32.mrb[0].mxu0
  %v738 = vadd.f32 0.0, %v737
  %v739 = vpop.f32.mrb[0].mxu0
  %740 = vmatprep.mubr.f32.mxu0 0.0
  %741 = vmatmul.mubr.f32.gmra.mrb[0].mxu0 %v31
  %v742 = vpop.f32.mrb[0].mxu0
  %v743 = vadd.f32 0.0, %v742
  %v744 = vpop.f32.mrb[0].mxu0
  %745 = vmatprep.mubr.f32.mxu0 0.0
  %746 = vmatmul.mubr.f32.gmra.mrb[0].mxu0 %v32
  %v747 = vpop.f32.mrb[0].mxu0
  %v748 = vadd.f32 0.0, %v747
  %v749 = vpop.f32.mrb[0].mxu0
  %750 = vmatprep.mubr.f32.mxu0 0.0
  %751 = vmatmul.mubr.f32.gmra.mrb[0].mxu0 %v33
  %v752 = vpop.f32.mrb[0].mxu0
  %v753 = vadd.f32 0.0, %v752
  %v754 = vpop.f32.mrb[0].mxu0
  %755 = vmatprep.mubr.f32.mxu0 0.0
  %756 = vmatmul.mubr.f32.gmra.mrb[0].mxu0 %v34
  %v757 = vpop.f32.mrb[0].mxu0
  %v758 = vadd.f32 0.0, %v757
  %v759 = vpop.f32.mrb[0].mxu0
  %760 = vmatprep.mubr.f32.mxu0 0.0
  %761 = vmatmul.mubr.f32.gmra.mrb[0].mxu0 %v35
  %v762 = vpop.f32.mrb[0].mxu0
  %v763 = vadd.f32 0.0, %v762
  %v764 = vpop.f32.mrb[0].mxu0
  %765 = vmatprep.mubr.f32.mxu0 0.0
  %766 = vmatmul.mubr.f32.gmra.mrb[0].mxu0 %v36
  %v767 = vpop.f32.mrb[0].mxu0
  %v768 = vadd.f32 0.0, %v767
  %v769 = vpop.f32.mrb[0].mxu0
  %770 = vmatprep.mubr.f32.mxu0 0.0
  %771 = vmatmul.mubr.f32.gmra.mrb[0].mxu0 %v37
  %v772 = vpop.f32.mrb[0].mxu0
  %v773 = vadd.f32 0.0, %v772
  %v774 = vpop.f32.mrb[0].mxu0
  %775 = vmatprep.mubr.f32.mxu0 0.0
  %776 = vmatmul.mubr.f32.gmra.mrb[0].mxu0 %v38
  %v777 = vpop.f32.mrb[0].mxu0
  %v778 = vadd.f32 0.0, %v777
  %v779 = vpop.f32.mrb[0].mxu0
  %780 = vdwg.mxu0
  %v781 = vadd.f32 %v703, %v708
  %v782 = vadd.f32 %v781, %v713
  %v783 = vadd.f32 %v782, %v718
  %v784 = vadd.f32 %v783, %v723
  %v785 = vadd.f32 %v784, %v728
  %v786 = vadd.f32 %v785, %v733
  %v787 = vadd.f32 %v786, %v738
  %v788 = vadd.f32 %v787, %v743
  %v789 = vadd.f32 %v788, %v748
  %v790 = vadd.f32 %v789, %v753
  %v791 = vadd.f32 %v790, %v758
  %v792 = vadd.f32 %v791, %v763
  %v793 = vadd.f32 %v792, %v768
  %v794 = vadd.f32 %v793, %v773
  %v795 = vadd.f32 %v794, %v778
  %v796 = vrot.slane %v795, 4
  %v797 = vadd.f32 %v795, %v796
  %v798 = vrot.slane %v797, 2
  %v799 = vadd.f32 %v797, %v798
  %v800 = vrot.slane %v799, 1
  %v801 = vadd.f32 %v799, %v800
  %v802 = vmul.f32 %v801, %v382
  %v803 = vmul.f32 %v703, %v703
  %v804 = vmul.f32 %v708, %v708
  %v805 = vmul.f32 %v713, %v713
  %v806 = vmul.f32 %v718, %v718
  %v807 = vmul.f32 %v723, %v723
  %v808 = vmul.f32 %v728, %v728
  %v809 = vmul.f32 %v733, %v733
  %v810 = vmul.f32 %v738, %v738
  %v811 = vmul.f32 %v743, %v743
  %v812 = vmul.f32 %v748, %v748
  %v813 = vmul.f32 %v753, %v753
  %v814 = vmul.f32 %v758, %v758
  %v815 = vmul.f32 %v763, %v763
  %v816 = vmul.f32 %v768, %v768
  %v817 = vmul.f32 %v773, %v773
  %v818 = vmul.f32 %v778, %v778
  %v819 = vadd.f32 %v803, %v804
  %v820 = vadd.f32 %v819, %v805
  %v821 = vadd.f32 %v820, %v806
  %v822 = vadd.f32 %v821, %v807
  %v823 = vadd.f32 %v822, %v808
  %v824 = vadd.f32 %v823, %v809
  %v825 = vadd.f32 %v824, %v810
  %v826 = vadd.f32 %v825, %v811
  %v827 = vadd.f32 %v826, %v812
  %v828 = vadd.f32 %v827, %v813
  %v829 = vadd.f32 %v828, %v814
  %v830 = vadd.f32 %v829, %v815
  %v831 = vadd.f32 %v830, %v816
  %v832 = vadd.f32 %v831, %v817
  %v833 = vadd.f32 %v832, %v818
  %v834 = vrot.slane %v833, 4
  %v835 = vadd.f32 %v833, %v834
  %v836 = vrot.slane %v835, 2
  %v837 = vadd.f32 %v835, %v836
  %v838 = vrot.slane %v837, 1
  %v839 = vadd.f32 %v837, %v838
  %v840 = vmul.f32 %v839, %v382
  %v841 = vmul.f32 %v802, %v802
  %v842 = vsub.f32 %v840, %v841
  %v843 = vmax.f32 %v842, 0.0
  %v844 = vsub.f32 %v703, %v802
  %v845 = vsub.f32 %v708, %v802
  %v846 = vsub.f32 %v713, %v802
  %v847 = vsub.f32 %v718, %v802
  %v848 = vsub.f32 %v723, %v802
  %v849 = vsub.f32 %v728, %v802
  %v850 = vsub.f32 %v733, %v802
  %v851 = vsub.f32 %v738, %v802
  %v852 = vsub.f32 %v743, %v802
  %v853 = vsub.f32 %v748, %v802
  %v854 = vsub.f32 %v753, %v802
  %v855 = vsub.f32 %v758, %v802
  %v856 = vsub.f32 %v763, %v802
  %v857 = vsub.f32 %v768, %v802
  %v858 = vsub.f32 %v773, %v802
  %v859 = vsub.f32 %v778, %v802
  %v860 = vadd.f32 %v843, 1e-05
  %v861 = vrsqrt.pop %v860
  %v862 = vmul.f32 %v844, %v861
  %v863 = vmul.f32 %v845, %v861
  %v864 = vmul.f32 %v846, %v861
  %v865 = vmul.f32 %v847, %v861
  %v866 = vmul.f32 %v848, %v861
  %v867 = vmul.f32 %v849, %v861
  %v868 = vmul.f32 %v850, %v861
  %v869 = vmul.f32 %v851, %v861
  %v870 = vmul.f32 %v852, %v861
  %v871 = vmul.f32 %v853, %v861
  %v872 = vmul.f32 %v854, %v861
  %v873 = vmul.f32 %v855, %v861
  %v874 = vmul.f32 %v856, %v861
  %v875 = vmul.f32 %v857, %v861
  %v876 = vmul.f32 %v858, %v861
  %v877 = vmul.f32 %v859, %v861
  %v878 = vmax.f32 %v862, 0.0
  %v879 = vmax.f32 %v863, 0.0
  %v880 = vmax.f32 %v864, 0.0
  %v881 = vmax.f32 %v865, 0.0
  %v882 = vmax.f32 %v866, 0.0
  %v883 = vmax.f32 %v867, 0.0
  %v884 = vmax.f32 %v868, 0.0
  %v885 = vmax.f32 %v869, 0.0
  %v886 = vmax.f32 %v870, 0.0
  %v887 = vmax.f32 %v871, 0.0
  %v888 = vmax.f32 %v872, 0.0
  %v889 = vmax.f32 %v873, 0.0
  %v890 = vmax.f32 %v874, 0.0
  %v891 = vmax.f32 %v875, 0.0
  %v892 = vmax.f32 %v876, 0.0
  %v893 = vmax.f32 %v877, 0.0
  %v894 = vlaneseq
  %v895 = vshrl.u32 %v894, 7
  %v896 = vadd.s32 %v895, 8
  %v897 = vadd.s32 %v895, 16
  %v898 = vadd.s32 %v895, 24
  %v899 = vadd.s32 %v895, 32
  %v900 = vadd.s32 %v895, 40
  %v901 = vadd.s32 %v895, 48
  %v902 = vadd.s32 %v895, 56
  %v903 = vadd.s32 %v895, 64
  %v904 = vadd.s32 %v895, 72
  %v905 = vadd.s32 %v895, 80
  %v906 = vadd.s32 %v895, 88
  %v907 = vadd.s32 %v895, 96
  %v908 = vadd.s32 %v895, 104
  %v909 = vadd.s32 %v895, 112
  %v910 = vadd.s32 %v895, 120
  %vm911 = vcmp.lt.s32.totalorder %v895, 8
  %vm912 = vcmp.lt.s32.totalorder %v896, 8
  %vm913 = vcmp.lt.s32.totalorder %v897, 8
  %vm914 = vcmp.lt.s32.totalorder %v898, 8
  %vm915 = vcmp.lt.s32.totalorder %v899, 8
  %vm916 = vcmp.lt.s32.totalorder %v900, 8
  %vm917 = vcmp.lt.s32.totalorder %v901, 8
  %vm918 = vcmp.lt.s32.totalorder %v902, 8
  %vm919 = vcmp.lt.s32.totalorder %v903, 8
  %vm920 = vcmp.lt.s32.totalorder %v904, 8
  %vm921 = vcmp.lt.s32.totalorder %v905, 8
  %vm922 = vcmp.lt.s32.totalorder %v906, 8
  %vm923 = vcmp.lt.s32.totalorder %v907, 8
  %vm924 = vcmp.lt.s32.totalorder %v908, 8
  %vm925 = vcmp.lt.s32.totalorder %v909, 8
  %vm926 = vcmp.lt.s32.totalorder %v910, 8
  %v927 = vsel %vm911, %v878, 0.0
  %v928 = vsel %vm912, %v879, 0.0
  %v929 = vsel %vm913, %v880, 0.0
  %v930 = vsel %vm914, %v881, 0.0
  %v931 = vsel %vm915, %v882, 0.0
  %v932 = vsel %vm916, %v883, 0.0
  %v933 = vsel %vm917, %v884, 0.0
  %v934 = vsel %vm918, %v885, 0.0
  %v935 = vsel %vm919, %v886, 0.0
  %v936 = vsel %vm920, %v887, 0.0
  %v937 = vsel %vm921, %v888, 0.0
  %v938 = vsel %vm922, %v889, 0.0
  %v939 = vsel %vm923, %v890, 0.0
  %v940 = vsel %vm924, %v891, 0.0
  %v941 = vsel %vm925, %v892, 0.0
  %v942 = vsel %vm926, %v893, 0.0
  %v943 = vld [vmem:[%s4] sm:$0xff]
  %v944 = vld [vmem:[%s4 + $0x8] sm:$0xff]
  %v945 = vld [vmem:[%s4 + $0x10] sm:$0xff]
  %v946 = vld [vmem:[%s4 + $0x18] sm:$0xff]
  %v947 = vld [vmem:[%s4 + $0x20] sm:$0xff]
  %v948 = vld [vmem:[%s4 + $0x28] sm:$0xff]
  %v949 = vld [vmem:[%s4 + $0x30] sm:$0xff]
  %v950 = vld [vmem:[%s4 + $0x38] sm:$0xff]
  %v951 = vld [vmem:[%s4 + $0x40] sm:$0xff]
  %v952 = vld [vmem:[%s4 + $0x48] sm:$0xff]
  %v953 = vld [vmem:[%s4 + $0x50] sm:$0xff]
  %v954 = vld [vmem:[%s4 + $0x58] sm:$0xff]
  %v955 = vld [vmem:[%s4 + $0x60] sm:$0xff]
  %v956 = vld [vmem:[%s4 + $0x68] sm:$0xff]
  %v957 = vld [vmem:[%s4 + $0x70] sm:$0xff]
  %v958 = vld [vmem:[%s4 + $0x78] sm:$0xff]
  %959 = vmatprep.subr.mxu0 0.0
  %960 = vmatpush1.msra.mxu0 %v943
  %961 = vmatprep.subr.mxu0 0.0
  %962 = vmatpush1.msra.mxu0 %v944
  %963 = vmatprep.subr.mxu0 0.0
  %964 = vmatpush1.msra.mxu0 %v945
  %965 = vmatprep.subr.mxu0 0.0
  %966 = vmatpush1.msra.mxu0 %v946
  %967 = vmatprep.subr.mxu0 0.0
  %968 = vmatpush1.msra.mxu0 %v947
  %969 = vmatprep.subr.mxu0 0.0
  %970 = vmatpush1.msra.mxu0 %v948
  %971 = vmatprep.subr.mxu0 0.0
  %972 = vmatpush1.msra.mxu0 %v949
  %973 = vmatprep.subr.mxu0 0.0
  %974 = vmatpush1.msra.mxu0 %v950
  %975 = vmatprep.subr.mxu0 0.0
  %976 = vmatpush1.msra.mxu0 %v951
  %977 = vmatprep.subr.mxu0 0.0
  %978 = vmatpush1.msra.mxu0 %v952
  %979 = vmatprep.subr.mxu0 0.0
  %980 = vmatpush1.msra.mxu0 %v953
  %981 = vmatprep.subr.mxu0 0.0
  %982 = vmatpush1.msra.mxu0 %v954
  %983 = vmatprep.subr.mxu0 0.0
  %984 = vmatpush1.msra.mxu0 %v955
  %985 = vmatprep.subr.mxu0 0.0
  %986 = vmatpush1.msra.mxu0 %v956
  %987 = vmatprep.subr.mxu0 0.0
  %988 = vmatpush1.msra.mxu0 %v957
  %989 = vmatprep.subr.mxu0 0.0
  %990 = vmatpush1.msra.mxu0 %v958
  %991 = vmatprep.subr.mxu0 0.0
  %992 = vmatpush1.msra.mxu0 0.0
  %993 = vmatprep.subr.mxu0 0.0
  %994 = vmatpush1.msra.mxu0 0.0
  %995 = vmatprep.subr.mxu0 0.0
  %996 = vmatpush1.msra.mxu0 0.0
  %997 = vmatprep.subr.mxu0 0.0
  %998 = vmatpush1.msra.mxu0 0.0
  %999 = vmatprep.subr.mxu0 0.0
  %1000 = vmatpush1.msra.mxu0 0.0
  %1001 = vmatprep.subr.mxu0 0.0
  %1002 = vmatpush1.msra.mxu0 0.0
  %1003 = vmatprep.subr.mxu0 0.0
  %1004 = vmatpush1.msra.mxu0 0.0
  %1005 = vmatprep.subr.mxu0 0.0
  %1006 = vmatpush1.msra.mxu0 0.0
  %1007 = vmatprep.subr.mxu0 0.0
  %1008 = vmatpush1.msra.mxu0 0.0
  %1009 = vmatprep.subr.mxu0 0.0
  %1010 = vmatpush1.msra.mxu0 0.0
  %1011 = vmatprep.subr.mxu0 0.0
  %1012 = vmatpush1.msra.mxu0 0.0
  %1013 = vmatprep.subr.mxu0 0.0
  %1014 = vmatpush1.msra.mxu0 0.0
  %1015 = vmatprep.subr.mxu0 0.0
  %1016 = vmatpush1.msra.mxu0 0.0
  %1017 = vmatprep.subr.mxu0 0.0
  %1018 = vmatpush1.msra.mxu0 0.0
  %1019 = vmatprep.subr.mxu0 0.0
  %1020 = vmatpush1.msra.mxu0 0.0
  %1021 = vmatprep.subr.mxu0 0.0
  %1022 = vmatpush1.msra.mxu0 0.0
  %1023 = vmatprep.mubr.f32.mxu0 0.0
  %1024 = vmatmul.mubr.f32.gmra.mrb[0].mxu0 %v927
  %v1025 = vpop.f32.mrb[0].mxu0
  %v1026 = vadd.f32 0.0, %v1025
  %v1027 = vpop.f32.mrb[0].mxu0
  %1028 = vmatprep.mubr.f32.mxu0 0.0
  %1029 = vmatmul.mubr.f32.gmra.mrb[0].mxu0 %v928
  %v1030 = vpop.f32.mrb[0].mxu0
  %v1031 = vadd.f32 0.0, %v1030
  %v1032 = vpop.f32.mrb[0].mxu0
  %1033 = vmatprep.mubr.f32.mxu0 0.0
  %1034 = vmatmul.mubr.f32.gmra.mrb[0].mxu0 %v929
  %v1035 = vpop.f32.mrb[0].mxu0
  %v1036 = vadd.f32 0.0, %v1035
  %v1037 = vpop.f32.mrb[0].mxu0
  %1038 = vmatprep.mubr.f32.mxu0 0.0
  %1039 = vmatmul.mubr.f32.gmra.mrb[0].mxu0 %v930
  %v1040 = vpop.f32.mrb[0].mxu0
  %v1041 = vadd.f32 0.0, %v1040
  %v1042 = vpop.f32.mrb[0].mxu0
  %1043 = vmatprep.mubr.f32.mxu0 0.0
  %1044 = vmatmul.mubr.f32.gmra.mrb[0].mxu0 %v931
  %v1045 = vpop.f32.mrb[0].mxu0
  %v1046 = vadd.f32 0.0, %v1045
  %v1047 = vpop.f32.mrb[0].mxu0
  %1048 = vmatprep.mubr.f32.mxu0 0.0
  %1049 = vmatmul.mubr.f32.gmra.mrb[0].mxu0 %v932
  %v1050 = vpop.f32.mrb[0].mxu0
  %v1051 = vadd.f32 0.0, %v1050
  %v1052 = vpop.f32.mrb[0].mxu0
  %1053 = vmatprep.mubr.f32.mxu0 0.0
  %1054 = vmatmul.mubr.f32.gmra.mrb[0].mxu0 %v933
  %v1055 = vpop.f32.mrb[0].mxu0
  %v1056 = vadd.f32 0.0, %v1055
  %v1057 = vpop.f32.mrb[0].mxu0
  %1058 = vmatprep.mubr.f32.mxu0 0.0
  %1059 = vmatmul.mubr.f32.gmra.mrb[0].mxu0 %v934
  %v1060 = vpop.f32.mrb[0].mxu0
  %v1061 = vadd.f32 0.0, %v1060
  %v1062 = vpop.f32.mrb[0].mxu0
  %1063 = vmatprep.mubr.f32.mxu0 0.0
  %1064 = vmatmul.mubr.f32.gmra.mrb[0].mxu0 %v935
  %v1065 = vpop.f32.mrb[0].mxu0
  %v1066 = vadd.f32 0.0, %v1065
  %v1067 = vpop.f32.mrb[0].mxu0
  %1068 = vmatprep.mubr.f32.mxu0 0.0
  %1069 = vmatmul.mubr.f32.gmra.mrb[0].mxu0 %v936
  %v1070 = vpop.f32.mrb[0].mxu0
  %v1071 = vadd.f32 0.0, %v1070
  %v1072 = vpop.f32.mrb[0].mxu0
  %1073 = vmatprep.mubr.f32.mxu0 0.0
  %1074 = vmatmul.mubr.f32.gmra.mrb[0].mxu0 %v937
  %v1075 = vpop.f32.mrb[0].mxu0
  %v1076 = vadd.f32 0.0, %v1075
  %v1077 = vpop.f32.mrb[0].mxu0
  %1078 = vmatprep.mubr.f32.mxu0 0.0
  %1079 = vmatmul.mubr.f32.gmra.mrb[0].mxu0 %v938
  %v1080 = vpop.f32.mrb[0].mxu0
  %v1081 = vadd.f32 0.0, %v1080
  %v1082 = vpop.f32.mrb[0].mxu0
  %1083 = vmatprep.mubr.f32.mxu0 0.0
  %1084 = vmatmul.mubr.f32.gmra.mrb[0].mxu0 %v939
  %v1085 = vpop.f32.mrb[0].mxu0
  %v1086 = vadd.f32 0.0, %v1085
  %v1087 = vpop.f32.mrb[0].mxu0
  %1088 = vmatprep.mubr.f32.mxu0 0.0
  %1089 = vmatmul.mubr.f32.gmra.mrb[0].mxu0 %v940
  %v1090 = vpop.f32.mrb[0].mxu0
  %v1091 = vadd.f32 0.0, %v1090
  %v1092 = vpop.f32.mrb[0].mxu0
  %1093 = vmatprep.mubr.f32.mxu0 0.0
  %1094 = vmatmul.mubr.f32.gmra.mrb[0].mxu0 %v941
  %v1095 = vpop.f32.mrb[0].mxu0
  %v1096 = vadd.f32 0.0, %v1095
  %v1097 = vpop.f32.mrb[0].mxu0
  %1098 = vmatprep.mubr.f32.mxu0 0.0
  %1099 = vmatmul.mubr.f32.gmra.mrb[0].mxu0 %v942
  %v1100 = vpop.f32.mrb[0].mxu0
  %v1101 = vadd.f32 0.0, %v1100
  %v1102 = vpop.f32.mrb[0].mxu0
  %1103 = vdwg.mxu0
  %1104 = vmatprep.subr.mxu0 0.0
  %1105 = vmatpush1.xpose.msra.mxu0 %v927
  %1106 = vmatprep.subr.mxu0 0.0
  %1107 = vmatpush1.xpose.msra.mxu0 %v928
  %1108 = vmatprep.subr.mxu0 0.0
  %1109 = vmatpush1.xpose.msra.mxu0 %v929
  %1110 = vmatprep.subr.mxu0 0.0
  %1111 = vmatpush1.xpose.msra.mxu0 %v930
  %1112 = vmatprep.subr.mxu0 0.0
  %1113 = vmatpush1.xpose.msra.mxu0 %v931
  %1114 = vmatprep.subr.mxu0 0.0
  %1115 = vmatpush1.xpose.msra.mxu0 %v932
  %1116 = vmatprep.subr.mxu0 0.0
  %1117 = vmatpush1.xpose.msra.mxu0 %v933
  %1118 = vmatprep.subr.mxu0 0.0
  %1119 = vmatpush1.xpose.msra.mxu0 %v934
  %1120 = vmatprep.subr.mxu0 0.0
  %1121 = vmatpush1.xpose.msra.mxu0 %v935
  %1122 = vmatprep.subr.mxu0 0.0
  %1123 = vmatpush1.xpose.msra.mxu0 %v936
  %1124 = vmatprep.subr.mxu0 0.0
  %1125 = vmatpush1.xpose.msra.mxu0 %v937
  %1126 = vmatprep.subr.mxu0 0.0
  %1127 = vmatpush1.xpose.msra.mxu0 %v938
  %1128 = vmatprep.subr.mxu0 0.0
  %1129 = vmatpush1.xpose.msra.mxu0 %v939
  %1130 = vmatprep.subr.mxu0 0.0
  %1131 = vmatpush1.xpose.msra.mxu0 %v940
  %1132 = vmatprep.subr.mxu0 0.0
  %1133 = vmatpush1.xpose.msra.mxu0 %v941
  %1134 = vmatprep.subr.mxu0 0.0
  %1135 = vmatpush1.xpose.msra.mxu0 %v942
  %1136 = vmatprep.subr.mxu0 0.0
  %1137 = vmatpush1.xpose.msra.mxu0 0.0
  %1138 = vmatprep.subr.mxu0 0.0
  %1139 = vmatpush1.xpose.msra.mxu0 0.0
  %1140 = vmatprep.subr.mxu0 0.0
  %1141 = vmatpush1.xpose.msra.mxu0 0.0
  %1142 = vmatprep.subr.mxu0 0.0
  %1143 = vmatpush1.xpose.msra.mxu0 0.0
  %1144 = vmatprep.subr.mxu0 0.0
  %1145 = vmatpush1.xpose.msra.mxu0 0.0
  %1146 = vmatprep.subr.mxu0 0.0
  %1147 = vmatpush1.xpose.msra.mxu0 0.0
  %1148 = vmatprep.subr.mxu0 0.0
  %1149 = vmatpush1.xpose.msra.mxu0 0.0
  %1150 = vmatprep.subr.mxu0 0.0
  %1151 = vmatpush1.xpose.msra.mxu0 0.0
  %1152 = vmatprep.subr.mxu0 0.0
  %1153 = vmatpush1.xpose.msra.mxu0 0.0
  %1154 = vmatprep.subr.mxu0 0.0
  %1155 = vmatpush1.xpose.msra.mxu0 0.0
  %1156 = vmatprep.subr.mxu0 0.0
  %1157 = vmatpush1.xpose.msra.mxu0 0.0
  %1158 = vmatprep.subr.mxu0 0.0
  %1159 = vmatpush1.xpose.msra.mxu0 0.0
  %1160 = vmatprep.subr.mxu0 0.0
  %1161 = vmatpush1.xpose.msra.mxu0 0.0
  %1162 = vmatprep.subr.mxu0 0.0
  %1163 = vmatpush1.xpose.msra.mxu0 0.0
  %1164 = vmatprep.subr.mxu0 0.0
  %1165 = vmatpush1.xpose.msra.mxu0 0.0
  %1166 = vmatprep.subr.mxu0 0.0
  %1167 = vmatpush1.xpose.msra.mxu0 0.0
  %1168 = vmatprep.mubr.f32.mxu0 0.0
  %1169 = vmatmul.mubr.f32.gmra.mrb[0].mxu0 %v1026
  %v1170 = vpop.f32.mrb[0].mxu0
  %v1171 = vadd.f32 0.0, %v1170
  %v1172 = vpop.f32.mrb[0].mxu0
  %1173 = vmatprep.mubr.f32.mxu0 0.0
  %1174 = vmatmul.mubr.f32.gmra.mrb[0].mxu0 %v1031
  %v1175 = vpop.f32.mrb[0].mxu0
  %v1176 = vadd.f32 0.0, %v1175
  %v1177 = vpop.f32.mrb[0].mxu0
  %1178 = vmatprep.mubr.f32.mxu0 0.0
  %1179 = vmatmul.mubr.f32.gmra.mrb[0].mxu0 %v1036
  %v1180 = vpop.f32.mrb[0].mxu0
  %v1181 = vadd.f32 0.0, %v1180
  %v1182 = vpop.f32.mrb[0].mxu0
  %1183 = vmatprep.mubr.f32.mxu0 0.0
  %1184 = vmatmul.mubr.f32.gmra.mrb[0].mxu0 %v1041
  %v1185 = vpop.f32.mrb[0].mxu0
  %v1186 = vadd.f32 0.0, %v1185
  %v1187 = vpop.f32.mrb[0].mxu0
  %1188 = vmatprep.mubr.f32.mxu0 0.0
  %1189 = vmatmul.mubr.f32.gmra.mrb[0].mxu0 %v1046
  %v1190 = vpop.f32.mrb[0].mxu0
  %v1191 = vadd.f32 0.0, %v1190
  %v1192 = vpop.f32.mrb[0].mxu0
  %1193 = vmatprep.mubr.f32.mxu0 0.0
  %1194 = vmatmul.mubr.f32.gmra.mrb[0].mxu0 %v1051
  %v1195 = vpop.f32.mrb[0].mxu0
  %v1196 = vadd.f32 0.0, %v1195
  %v1197 = vpop.f32.mrb[0].mxu0
  %1198 = vmatprep.mubr.f32.mxu0 0.0
  %1199 = vmatmul.mubr.f32.gmra.mrb[0].mxu0 %v1056
  %v1200 = vpop.f32.mrb[0].mxu0
  %v1201 = vadd.f32 0.0, %v1200
  %v1202 = vpop.f32.mrb[0].mxu0
  %1203 = vmatprep.mubr.f32.mxu0 0.0
  %1204 = vmatmul.mubr.f32.gmra.mrb[0].mxu0 %v1061
  %v1205 = vpop.f32.mrb[0].mxu0
  %v1206 = vadd.f32 0.0, %v1205
  %v1207 = vpop.f32.mrb[0].mxu0
  %1208 = vmatprep.mubr.f32.mxu0 0.0
  %1209 = vmatmul.mubr.f32.gmra.mrb[0].mxu0 %v1066
  %v1210 = vpop.f32.mrb[0].mxu0
  %v1211 = vadd.f32 0.0, %v1210
  %v1212 = vpop.f32.mrb[0].mxu0
  %1213 = vmatprep.mubr.f32.mxu0 0.0
  %1214 = vmatmul.mubr.f32.gmra.mrb[0].mxu0 %v1071
  %v1215 = vpop.f32.mrb[0].mxu0
  %v1216 = vadd.f32 0.0, %v1215
  %v1217 = vpop.f32.mrb[0].mxu0
  %1218 = vmatprep.mubr.f32.mxu0 0.0
  %1219 = vmatmul.mubr.f32.gmra.mrb[0].mxu0 %v1076
  %v1220 = vpop.f32.mrb[0].mxu0
  %v1221 = vadd.f32 0.0, %v1220
  %v1222 = vpop.f32.mrb[0].mxu0
  %1223 = vmatprep.mubr.f32.mxu0 0.0
  %1224 = vmatmul.mubr.f32.gmra.mrb[0].mxu0 %v1081
  %v1225 = vpop.f32.mrb[0].mxu0
  %v1226 = vadd.f32 0.0, %v1225
  %v1227 = vpop.f32.mrb[0].mxu0
  %1228 = vmatprep.mubr.f32.mxu0 0.0
  %1229 = vmatmul.mubr.f32.gmra.mrb[0].mxu0 %v1086
  %v1230 = vpop.f32.mrb[0].mxu0
  %v1231 = vadd.f32 0.0, %v1230
  %v1232 = vpop.f32.mrb[0].mxu0
  %1233 = vmatprep.mubr.f32.mxu0 0.0
  %1234 = vmatmul.mubr.f32.gmra.mrb[0].mxu0 %v1091
  %v1235 = vpop.f32.mrb[0].mxu0
  %v1236 = vadd.f32 0.0, %v1235
  %v1237 = vpop.f32.mrb[0].mxu0
  %1238 = vmatprep.mubr.f32.mxu0 0.0
  %1239 = vmatmul.mubr.f32.gmra.mrb[0].mxu0 %v1096
  %v1240 = vpop.f32.mrb[0].mxu0
  %v1241 = vadd.f32 0.0, %v1240
  %v1242 = vpop.f32.mrb[0].mxu0
  %1243 = vmatprep.mubr.f32.mxu0 0.0
  %1244 = vmatmul.mubr.f32.gmra.mrb[0].mxu0 %v1101
  %v1245 = vpop.f32.mrb[0].mxu0
  %v1246 = vadd.f32 0.0, %v1245
  %v1247 = vpop.f32.mrb[0].mxu0
  %1248 = vdwg.mxu0
  %v1249 = vlaneseq
  %v1250 = vand.u32 %v1249, 127
  %vm1251 = vcmp.lt.s32.totalorder %v1250, 8
  %v1252 = vsel %vm1251, %v1171, -1e+30
  %v1253 = vsel %vm1251, %v1176, -1e+30
  %v1254 = vsel %vm1251, %v1181, -1e+30
  %v1255 = vsel %vm1251, %v1186, -1e+30
  %v1256 = vsel %vm1251, %v1191, -1e+30
  %v1257 = vsel %vm1251, %v1196, -1e+30
  %v1258 = vsel %vm1251, %v1201, -1e+30
  %v1259 = vsel %vm1251, %v1206, -1e+30
  %v1260 = vsel %vm1251, %v1211, -1e+30
  %v1261 = vsel %vm1251, %v1216, -1e+30
  %v1262 = vsel %vm1251, %v1221, -1e+30
  %v1263 = vsel %vm1251, %v1226, -1e+30
  %v1264 = vsel %vm1251, %v1231, -1e+30
  %v1265 = vsel %vm1251, %v1236, -1e+30
  %v1266 = vsel %vm1251, %v1241, -1e+30
  %v1267 = vsel %vm1251, %v1246, -1e+30
  %1268 = vmax.xlane.f32.xlu0 %v1252
  %v1269 = vpop.xlane.xlu0 %1268
  %1270 = vmax.xlane.f32.xlu0 %v1253
  %v1271 = vpop.xlane.xlu0 %1270
  %1272 = vmax.xlane.f32.xlu0 %v1254
  %v1273 = vpop.xlane.xlu0 %1272
  %1274 = vmax.xlane.f32.xlu0 %v1255
  %v1275 = vpop.xlane.xlu0 %1274
  %1276 = vmax.xlane.f32.xlu0 %v1256
  %v1277 = vpop.xlane.xlu0 %1276
  %1278 = vmax.xlane.f32.xlu0 %v1257
  %v1279 = vpop.xlane.xlu0 %1278
  %1280 = vmax.xlane.f32.xlu0 %v1258
  %v1281 = vpop.xlane.xlu0 %1280
  %1282 = vmax.xlane.f32.xlu0 %v1259
  %v1283 = vpop.xlane.xlu0 %1282
  %1284 = vmax.xlane.f32.xlu0 %v1260
  %v1285 = vpop.xlane.xlu0 %1284
  %1286 = vmax.xlane.f32.xlu0 %v1261
  %v1287 = vpop.xlane.xlu0 %1286
  %1288 = vmax.xlane.f32.xlu0 %v1262
  %v1289 = vpop.xlane.xlu0 %1288
  %1290 = vmax.xlane.f32.xlu0 %v1263
  %v1291 = vpop.xlane.xlu0 %1290
  %1292 = vmax.xlane.f32.xlu0 %v1264
  %v1293 = vpop.xlane.xlu0 %1292
  %1294 = vmax.xlane.f32.xlu0 %v1265
  %v1295 = vpop.xlane.xlu0 %1294
  %1296 = vmax.xlane.f32.xlu0 %v1266
  %v1297 = vpop.xlane.xlu0 %1296
  %1298 = vmax.xlane.f32.xlu0 %v1267
  %v1299 = vpop.xlane.xlu0 %1298
  %v1300 = vsub.f32 %v1252, %v1269
  %v1301 = vsub.f32 %v1253, %v1271
  %v1302 = vsub.f32 %v1254, %v1273
  %v1303 = vsub.f32 %v1255, %v1275
  %v1304 = vsub.f32 %v1256, %v1277
  %v1305 = vsub.f32 %v1257, %v1279
  %v1306 = vsub.f32 %v1258, %v1281
  %v1307 = vsub.f32 %v1259, %v1283
  %v1308 = vsub.f32 %v1260, %v1285
  %v1309 = vsub.f32 %v1261, %v1287
  %v1310 = vsub.f32 %v1262, %v1289
  %v1311 = vsub.f32 %v1263, %v1291
  %v1312 = vsub.f32 %v1264, %v1293
  %v1313 = vsub.f32 %v1265, %v1295
  %v1314 = vsub.f32 %v1266, %v1297
  %v1315 = vsub.f32 %v1267, %v1299
  %v1316 = vmul.f32 %v1300, 1.442695
  %v1317 = vpow.pop %v1316
  %v1318 = vmul.f32 %v1301, 1.442695
  %v1319 = vpow.pop %v1318
  %v1320 = vmul.f32 %v1302, 1.442695
  %v1321 = vpow.pop %v1320
  %v1322 = vmul.f32 %v1303, 1.442695
  %v1323 = vpow.pop %v1322
  %v1324 = vmul.f32 %v1304, 1.442695
  %v1325 = vpow.pop %v1324
  %v1326 = vmul.f32 %v1305, 1.442695
  %v1327 = vpow.pop %v1326
  %v1328 = vmul.f32 %v1306, 1.442695
  %v1329 = vpow.pop %v1328
  %v1330 = vmul.f32 %v1307, 1.442695
  %v1331 = vpow.pop %v1330
  %v1332 = vmul.f32 %v1308, 1.442695
  %v1333 = vpow.pop %v1332
  %v1334 = vmul.f32 %v1309, 1.442695
  %v1335 = vpow.pop %v1334
  %v1336 = vmul.f32 %v1310, 1.442695
  %v1337 = vpow.pop %v1336
  %v1338 = vmul.f32 %v1311, 1.442695
  %v1339 = vpow.pop %v1338
  %v1340 = vmul.f32 %v1312, 1.442695
  %v1341 = vpow.pop %v1340
  %v1342 = vmul.f32 %v1313, 1.442695
  %v1343 = vpow.pop %v1342
  %v1344 = vmul.f32 %v1314, 1.442695
  %v1345 = vpow.pop %v1344
  %v1346 = vmul.f32 %v1315, 1.442695
  %v1347 = vpow.pop %v1346
  %1348 = vadd.xlane.f32.xlu0 %v1317
  %v1349 = vpop.xlane.xlu0 %1348
  %1350 = vadd.xlane.f32.xlu0 %v1319
  %v1351 = vpop.xlane.xlu0 %1350
  %1352 = vadd.xlane.f32.xlu0 %v1321
  %v1353 = vpop.xlane.xlu0 %1352
  %1354 = vadd.xlane.f32.xlu0 %v1323
  %v1355 = vpop.xlane.xlu0 %1354
  %1356 = vadd.xlane.f32.xlu0 %v1325
  %v1357 = vpop.xlane.xlu0 %1356
  %1358 = vadd.xlane.f32.xlu0 %v1327
  %v1359 = vpop.xlane.xlu0 %1358
  %1360 = vadd.xlane.f32.xlu0 %v1329
  %v1361 = vpop.xlane.xlu0 %1360
  %1362 = vadd.xlane.f32.xlu0 %v1331
  %v1363 = vpop.xlane.xlu0 %1362
  %1364 = vadd.xlane.f32.xlu0 %v1333
  %v1365 = vpop.xlane.xlu0 %1364
  %1366 = vadd.xlane.f32.xlu0 %v1335
  %v1367 = vpop.xlane.xlu0 %1366
  %1368 = vadd.xlane.f32.xlu0 %v1337
  %v1369 = vpop.xlane.xlu0 %1368
  %1370 = vadd.xlane.f32.xlu0 %v1339
  %v1371 = vpop.xlane.xlu0 %1370
  %1372 = vadd.xlane.f32.xlu0 %v1341
  %v1373 = vpop.xlane.xlu0 %1372
  %1374 = vadd.xlane.f32.xlu0 %v1343
  %v1375 = vpop.xlane.xlu0 %1374
  %1376 = vadd.xlane.f32.xlu0 %v1345
  %v1377 = vpop.xlane.xlu0 %1376
  %1378 = vadd.xlane.f32.xlu0 %v1347
  %v1379 = vpop.xlane.xlu0 %1378
  %v1380 = vrcp.pop %v1349
  %v1381 = vmul.f32 %v1317, %v1380
  %v1382 = vrcp.pop %v1351
  %v1383 = vmul.f32 %v1319, %v1382
  %v1384 = vrcp.pop %v1353
  %v1385 = vmul.f32 %v1321, %v1384
  %v1386 = vrcp.pop %v1355
  %v1387 = vmul.f32 %v1323, %v1386
  %v1388 = vrcp.pop %v1357
  %v1389 = vmul.f32 %v1325, %v1388
  %v1390 = vrcp.pop %v1359
  %v1391 = vmul.f32 %v1327, %v1390
  %v1392 = vrcp.pop %v1361
  %v1393 = vmul.f32 %v1329, %v1392
  %v1394 = vrcp.pop %v1363
  %v1395 = vmul.f32 %v1331, %v1394
  %v1396 = vrcp.pop %v1365
  %v1397 = vmul.f32 %v1333, %v1396
  %v1398 = vrcp.pop %v1367
  %v1399 = vmul.f32 %v1335, %v1398
  %v1400 = vrcp.pop %v1369
  %v1401 = vmul.f32 %v1337, %v1400
  %v1402 = vrcp.pop %v1371
  %v1403 = vmul.f32 %v1339, %v1402
  %v1404 = vrcp.pop %v1373
  %v1405 = vmul.f32 %v1341, %v1404
  %v1406 = vrcp.pop %v1375
  %v1407 = vmul.f32 %v1343, %v1406
  %v1408 = vrcp.pop %v1377
  %v1409 = vmul.f32 %v1345, %v1408
  %v1410 = vrcp.pop %v1379
  %v1411 = vmul.f32 %v1347, %v1410
  %1412 = vmatprep.subr.mxu0 0.0
  %1413 = vmatpush1.msra.mxu0 %v927
  %1414 = vmatprep.subr.mxu0 0.0
  %1415 = vmatpush1.msra.mxu0 %v928
  %1416 = vmatprep.subr.mxu0 0.0
  %1417 = vmatpush1.msra.mxu0 %v929
  %1418 = vmatprep.subr.mxu0 0.0
  %1419 = vmatpush1.msra.mxu0 %v930
  %1420 = vmatprep.subr.mxu0 0.0
  %1421 = vmatpush1.msra.mxu0 %v931
  %1422 = vmatprep.subr.mxu0 0.0
  %1423 = vmatpush1.msra.mxu0 %v932
  %1424 = vmatprep.subr.mxu0 0.0
  %1425 = vmatpush1.msra.mxu0 %v933
  %1426 = vmatprep.subr.mxu0 0.0
  %1427 = vmatpush1.msra.mxu0 %v934
  %1428 = vmatprep.subr.mxu0 0.0
  %1429 = vmatpush1.msra.mxu0 %v935
  %1430 = vmatprep.subr.mxu0 0.0
  %1431 = vmatpush1.msra.mxu0 %v936
  %1432 = vmatprep.subr.mxu0 0.0
  %1433 = vmatpush1.msra.mxu0 %v937
  %1434 = vmatprep.subr.mxu0 0.0
  %1435 = vmatpush1.msra.mxu0 %v938
  %1436 = vmatprep.subr.mxu0 0.0
  %1437 = vmatpush1.msra.mxu0 %v939
  %1438 = vmatprep.subr.mxu0 0.0
  %1439 = vmatpush1.msra.mxu0 %v940
  %1440 = vmatprep.subr.mxu0 0.0
  %1441 = vmatpush1.msra.mxu0 %v941
  %1442 = vmatprep.subr.mxu0 0.0
  %1443 = vmatpush1.msra.mxu0 %v942
  %1444 = vmatprep.subr.mxu0 0.0
  %1445 = vmatpush1.msra.mxu0 0.0
  %1446 = vmatprep.subr.mxu0 0.0
  %1447 = vmatpush1.msra.mxu0 0.0
  %1448 = vmatprep.subr.mxu0 0.0
  %1449 = vmatpush1.msra.mxu0 0.0
  %1450 = vmatprep.subr.mxu0 0.0
  %1451 = vmatpush1.msra.mxu0 0.0
  %1452 = vmatprep.subr.mxu0 0.0
  %1453 = vmatpush1.msra.mxu0 0.0
  %1454 = vmatprep.subr.mxu0 0.0
  %1455 = vmatpush1.msra.mxu0 0.0
  %1456 = vmatprep.subr.mxu0 0.0
  %1457 = vmatpush1.msra.mxu0 0.0
  %1458 = vmatprep.subr.mxu0 0.0
  %1459 = vmatpush1.msra.mxu0 0.0
  %1460 = vmatprep.subr.mxu0 0.0
  %1461 = vmatpush1.msra.mxu0 0.0
  %1462 = vmatprep.subr.mxu0 0.0
  %1463 = vmatpush1.msra.mxu0 0.0
  %1464 = vmatprep.subr.mxu0 0.0
  %1465 = vmatpush1.msra.mxu0 0.0
  %1466 = vmatprep.subr.mxu0 0.0
  %1467 = vmatpush1.msra.mxu0 0.0
  %1468 = vmatprep.subr.mxu0 0.0
  %1469 = vmatpush1.msra.mxu0 0.0
  %1470 = vmatprep.subr.mxu0 0.0
  %1471 = vmatpush1.msra.mxu0 0.0
  %1472 = vmatprep.subr.mxu0 0.0
  %1473 = vmatpush1.msra.mxu0 0.0
  %1474 = vmatprep.subr.mxu0 0.0
  %1475 = vmatpush1.msra.mxu0 0.0
  %1476 = vmatprep.mubr.f32.mxu0 0.0
  %1477 = vmatmul.mubr.f32.gmra.mrb[0].mxu0 %v1381
  %v1478 = vpop.f32.mrb[0].mxu0
  %v1479 = vadd.f32 0.0, %v1478
  %v1480 = vpop.f32.mrb[0].mxu0
  %1481 = vmatprep.mubr.f32.mxu0 0.0
  %1482 = vmatmul.mubr.f32.gmra.mrb[0].mxu0 %v1383
  %v1483 = vpop.f32.mrb[0].mxu0
  %v1484 = vadd.f32 0.0, %v1483
  %v1485 = vpop.f32.mrb[0].mxu0
  %1486 = vmatprep.mubr.f32.mxu0 0.0
  %1487 = vmatmul.mubr.f32.gmra.mrb[0].mxu0 %v1385
  %v1488 = vpop.f32.mrb[0].mxu0
  %v1489 = vadd.f32 0.0, %v1488
  %v1490 = vpop.f32.mrb[0].mxu0
  %1491 = vmatprep.mubr.f32.mxu0 0.0
  %1492 = vmatmul.mubr.f32.gmra.mrb[0].mxu0 %v1387
  %v1493 = vpop.f32.mrb[0].mxu0
  %v1494 = vadd.f32 0.0, %v1493
  %v1495 = vpop.f32.mrb[0].mxu0
  %1496 = vmatprep.mubr.f32.mxu0 0.0
  %1497 = vmatmul.mubr.f32.gmra.mrb[0].mxu0 %v1389
  %v1498 = vpop.f32.mrb[0].mxu0
  %v1499 = vadd.f32 0.0, %v1498
  %v1500 = vpop.f32.mrb[0].mxu0
  %1501 = vmatprep.mubr.f32.mxu0 0.0
  %1502 = vmatmul.mubr.f32.gmra.mrb[0].mxu0 %v1391
  %v1503 = vpop.f32.mrb[0].mxu0
  %v1504 = vadd.f32 0.0, %v1503
  %v1505 = vpop.f32.mrb[0].mxu0
  %1506 = vmatprep.mubr.f32.mxu0 0.0
  %1507 = vmatmul.mubr.f32.gmra.mrb[0].mxu0 %v1393
  %v1508 = vpop.f32.mrb[0].mxu0
  %v1509 = vadd.f32 0.0, %v1508
  %v1510 = vpop.f32.mrb[0].mxu0
  %1511 = vmatprep.mubr.f32.mxu0 0.0
  %1512 = vmatmul.mubr.f32.gmra.mrb[0].mxu0 %v1395
  %v1513 = vpop.f32.mrb[0].mxu0
  %v1514 = vadd.f32 0.0, %v1513
  %v1515 = vpop.f32.mrb[0].mxu0
  %1516 = vmatprep.mubr.f32.mxu0 0.0
  %1517 = vmatmul.mubr.f32.gmra.mrb[0].mxu0 %v1397
  %v1518 = vpop.f32.mrb[0].mxu0
  %v1519 = vadd.f32 0.0, %v1518
  %v1520 = vpop.f32.mrb[0].mxu0
  %1521 = vmatprep.mubr.f32.mxu0 0.0
  %1522 = vmatmul.mubr.f32.gmra.mrb[0].mxu0 %v1399
  %v1523 = vpop.f32.mrb[0].mxu0
  %v1524 = vadd.f32 0.0, %v1523
  %v1525 = vpop.f32.mrb[0].mxu0
  %1526 = vmatprep.mubr.f32.mxu0 0.0
  %1527 = vmatmul.mubr.f32.gmra.mrb[0].mxu0 %v1401
  %v1528 = vpop.f32.mrb[0].mxu0
  %v1529 = vadd.f32 0.0, %v1528
  %v1530 = vpop.f32.mrb[0].mxu0
  %1531 = vmatprep.mubr.f32.mxu0 0.0
  %1532 = vmatmul.mubr.f32.gmra.mrb[0].mxu0 %v1403
  %v1533 = vpop.f32.mrb[0].mxu0
  %v1534 = vadd.f32 0.0, %v1533
  %v1535 = vpop.f32.mrb[0].mxu0
  %1536 = vmatprep.mubr.f32.mxu0 0.0
  %1537 = vmatmul.mubr.f32.gmra.mrb[0].mxu0 %v1405
  %v1538 = vpop.f32.mrb[0].mxu0
  %v1539 = vadd.f32 0.0, %v1538
  %v1540 = vpop.f32.mrb[0].mxu0
  %1541 = vmatprep.mubr.f32.mxu0 0.0
  %1542 = vmatmul.mubr.f32.gmra.mrb[0].mxu0 %v1407
  %v1543 = vpop.f32.mrb[0].mxu0
  %v1544 = vadd.f32 0.0, %v1543
  %v1545 = vpop.f32.mrb[0].mxu0
  %1546 = vmatprep.mubr.f32.mxu0 0.0
  %1547 = vmatmul.mubr.f32.gmra.mrb[0].mxu0 %v1409
  %v1548 = vpop.f32.mrb[0].mxu0
  %v1549 = vadd.f32 0.0, %v1548
  %v1550 = vpop.f32.mrb[0].mxu0
  %1551 = vmatprep.mubr.f32.mxu0 0.0
  %1552 = vmatmul.mubr.f32.gmra.mrb[0].mxu0 %v1411
  %v1553 = vpop.f32.mrb[0].mxu0
  %v1554 = vadd.f32 0.0, %v1553
  %v1555 = vpop.f32.mrb[0].mxu0
  %1556 = vdwg.mxu0
  %v1557 = vld [vmem:[%s5] sm:$0xff]
  %v1558 = vld [vmem:[%s5 + $0x8] sm:$0xff]
  %v1559 = vld [vmem:[%s5 + $0x10] sm:$0xff]
  %v1560 = vld [vmem:[%s5 + $0x18] sm:$0xff]
  %v1561 = vld [vmem:[%s5 + $0x20] sm:$0xff]
  %v1562 = vld [vmem:[%s5 + $0x28] sm:$0xff]
  %v1563 = vld [vmem:[%s5 + $0x30] sm:$0xff]
  %v1564 = vld [vmem:[%s5 + $0x38] sm:$0xff]
  %v1565 = vld [vmem:[%s5 + $0x40] sm:$0xff]
  %v1566 = vld [vmem:[%s5 + $0x48] sm:$0xff]
  %v1567 = vld [vmem:[%s5 + $0x50] sm:$0xff]
  %v1568 = vld [vmem:[%s5 + $0x58] sm:$0xff]
  %v1569 = vld [vmem:[%s5 + $0x60] sm:$0xff]
  %v1570 = vld [vmem:[%s5 + $0x68] sm:$0xff]
  %v1571 = vld [vmem:[%s5 + $0x70] sm:$0xff]
  %v1572 = vld [vmem:[%s5 + $0x78] sm:$0xff]
  %1573 = vmatprep.subr.mxu0 0.0
  %1574 = vmatpush1.msra.mxu0 %v1557
  %1575 = vmatprep.subr.mxu0 0.0
  %1576 = vmatpush1.msra.mxu0 %v1558
  %1577 = vmatprep.subr.mxu0 0.0
  %1578 = vmatpush1.msra.mxu0 %v1559
  %1579 = vmatprep.subr.mxu0 0.0
  %1580 = vmatpush1.msra.mxu0 %v1560
  %1581 = vmatprep.subr.mxu0 0.0
  %1582 = vmatpush1.msra.mxu0 %v1561
  %1583 = vmatprep.subr.mxu0 0.0
  %1584 = vmatpush1.msra.mxu0 %v1562
  %1585 = vmatprep.subr.mxu0 0.0
  %1586 = vmatpush1.msra.mxu0 %v1563
  %1587 = vmatprep.subr.mxu0 0.0
  %1588 = vmatpush1.msra.mxu0 %v1564
  %1589 = vmatprep.subr.mxu0 0.0
  %1590 = vmatpush1.msra.mxu0 %v1565
  %1591 = vmatprep.subr.mxu0 0.0
  %1592 = vmatpush1.msra.mxu0 %v1566
  %1593 = vmatprep.subr.mxu0 0.0
  %1594 = vmatpush1.msra.mxu0 %v1567
  %1595 = vmatprep.subr.mxu0 0.0
  %1596 = vmatpush1.msra.mxu0 %v1568
  %1597 = vmatprep.subr.mxu0 0.0
  %1598 = vmatpush1.msra.mxu0 %v1569
  %1599 = vmatprep.subr.mxu0 0.0
  %1600 = vmatpush1.msra.mxu0 %v1570
  %1601 = vmatprep.subr.mxu0 0.0
  %1602 = vmatpush1.msra.mxu0 %v1571
  %1603 = vmatprep.subr.mxu0 0.0
  %1604 = vmatpush1.msra.mxu0 %v1572
  %1605 = vmatprep.subr.mxu0 0.0
  %1606 = vmatpush1.msra.mxu0 0.0
  %1607 = vmatprep.subr.mxu0 0.0
  %1608 = vmatpush1.msra.mxu0 0.0
  %1609 = vmatprep.subr.mxu0 0.0
  %1610 = vmatpush1.msra.mxu0 0.0
  %1611 = vmatprep.subr.mxu0 0.0
  %1612 = vmatpush1.msra.mxu0 0.0
  %1613 = vmatprep.subr.mxu0 0.0
  %1614 = vmatpush1.msra.mxu0 0.0
  %1615 = vmatprep.subr.mxu0 0.0
  %1616 = vmatpush1.msra.mxu0 0.0
  %1617 = vmatprep.subr.mxu0 0.0
  %1618 = vmatpush1.msra.mxu0 0.0
  %1619 = vmatprep.subr.mxu0 0.0
  %1620 = vmatpush1.msra.mxu0 0.0
  %1621 = vmatprep.subr.mxu0 0.0
  %1622 = vmatpush1.msra.mxu0 0.0
  %1623 = vmatprep.subr.mxu0 0.0
  %1624 = vmatpush1.msra.mxu0 0.0
  %1625 = vmatprep.subr.mxu0 0.0
  %1626 = vmatpush1.msra.mxu0 0.0
  %1627 = vmatprep.subr.mxu0 0.0
  %1628 = vmatpush1.msra.mxu0 0.0
  %1629 = vmatprep.subr.mxu0 0.0
  %1630 = vmatpush1.msra.mxu0 0.0
  %1631 = vmatprep.subr.mxu0 0.0
  %1632 = vmatpush1.msra.mxu0 0.0
  %1633 = vmatprep.subr.mxu0 0.0
  %1634 = vmatpush1.msra.mxu0 0.0
  %1635 = vmatprep.subr.mxu0 0.0
  %1636 = vmatpush1.msra.mxu0 0.0
  %1637 = vmatprep.mubr.f32.mxu0 0.0
  %1638 = vmatmul.mubr.f32.gmra.mrb[0].mxu0 %v1479
  %v1639 = vpop.f32.mrb[0].mxu0
  %v1640 = vadd.f32 0.0, %v1639
  %v1641 = vpop.f32.mrb[0].mxu0
  %1642 = vmatprep.mubr.f32.mxu0 0.0
  %1643 = vmatmul.mubr.f32.gmra.mrb[0].mxu0 %v1484
  %v1644 = vpop.f32.mrb[0].mxu0
  %v1645 = vadd.f32 0.0, %v1644
  %v1646 = vpop.f32.mrb[0].mxu0
  %1647 = vmatprep.mubr.f32.mxu0 0.0
  %1648 = vmatmul.mubr.f32.gmra.mrb[0].mxu0 %v1489
  %v1649 = vpop.f32.mrb[0].mxu0
  %v1650 = vadd.f32 0.0, %v1649
  %v1651 = vpop.f32.mrb[0].mxu0
  %1652 = vmatprep.mubr.f32.mxu0 0.0
  %1653 = vmatmul.mubr.f32.gmra.mrb[0].mxu0 %v1494
  %v1654 = vpop.f32.mrb[0].mxu0
  %v1655 = vadd.f32 0.0, %v1654
  %v1656 = vpop.f32.mrb[0].mxu0
  %1657 = vmatprep.mubr.f32.mxu0 0.0
  %1658 = vmatmul.mubr.f32.gmra.mrb[0].mxu0 %v1499
  %v1659 = vpop.f32.mrb[0].mxu0
  %v1660 = vadd.f32 0.0, %v1659
  %v1661 = vpop.f32.mrb[0].mxu0
  %1662 = vmatprep.mubr.f32.mxu0 0.0
  %1663 = vmatmul.mubr.f32.gmra.mrb[0].mxu0 %v1504
  %v1664 = vpop.f32.mrb[0].mxu0
  %v1665 = vadd.f32 0.0, %v1664
  %v1666 = vpop.f32.mrb[0].mxu0
  %1667 = vmatprep.mubr.f32.mxu0 0.0
  %1668 = vmatmul.mubr.f32.gmra.mrb[0].mxu0 %v1509
  %v1669 = vpop.f32.mrb[0].mxu0
  %v1670 = vadd.f32 0.0, %v1669
  %v1671 = vpop.f32.mrb[0].mxu0
  %1672 = vmatprep.mubr.f32.mxu0 0.0
  %1673 = vmatmul.mubr.f32.gmra.mrb[0].mxu0 %v1514
  %v1674 = vpop.f32.mrb[0].mxu0
  %v1675 = vadd.f32 0.0, %v1674
  %v1676 = vpop.f32.mrb[0].mxu0
  %1677 = vmatprep.mubr.f32.mxu0 0.0
  %1678 = vmatmul.mubr.f32.gmra.mrb[0].mxu0 %v1519
  %v1679 = vpop.f32.mrb[0].mxu0
  %v1680 = vadd.f32 0.0, %v1679
  %v1681 = vpop.f32.mrb[0].mxu0
  %1682 = vmatprep.mubr.f32.mxu0 0.0
  %1683 = vmatmul.mubr.f32.gmra.mrb[0].mxu0 %v1524
  %v1684 = vpop.f32.mrb[0].mxu0
  %v1685 = vadd.f32 0.0, %v1684
  %v1686 = vpop.f32.mrb[0].mxu0
  %1687 = vmatprep.mubr.f32.mxu0 0.0
  %1688 = vmatmul.mubr.f32.gmra.mrb[0].mxu0 %v1529
  %v1689 = vpop.f32.mrb[0].mxu0
  %v1690 = vadd.f32 0.0, %v1689
  %v1691 = vpop.f32.mrb[0].mxu0
  %1692 = vmatprep.mubr.f32.mxu0 0.0
  %1693 = vmatmul.mubr.f32.gmra.mrb[0].mxu0 %v1534
  %v1694 = vpop.f32.mrb[0].mxu0
  %v1695 = vadd.f32 0.0, %v1694
  %v1696 = vpop.f32.mrb[0].mxu0
  %1697 = vmatprep.mubr.f32.mxu0 0.0
  %1698 = vmatmul.mubr.f32.gmra.mrb[0].mxu0 %v1539
  %v1699 = vpop.f32.mrb[0].mxu0
  %v1700 = vadd.f32 0.0, %v1699
  %v1701 = vpop.f32.mrb[0].mxu0
  %1702 = vmatprep.mubr.f32.mxu0 0.0
  %1703 = vmatmul.mubr.f32.gmra.mrb[0].mxu0 %v1544
  %v1704 = vpop.f32.mrb[0].mxu0
  %v1705 = vadd.f32 0.0, %v1704
  %v1706 = vpop.f32.mrb[0].mxu0
  %1707 = vmatprep.mubr.f32.mxu0 0.0
  %1708 = vmatmul.mubr.f32.gmra.mrb[0].mxu0 %v1549
  %v1709 = vpop.f32.mrb[0].mxu0
  %v1710 = vadd.f32 0.0, %v1709
  %v1711 = vpop.f32.mrb[0].mxu0
  %1712 = vmatprep.mubr.f32.mxu0 0.0
  %1713 = vmatmul.mubr.f32.gmra.mrb[0].mxu0 %v1554
  %v1714 = vpop.f32.mrb[0].mxu0
  %v1715 = vadd.f32 0.0, %v1714
  %v1716 = vpop.f32.mrb[0].mxu0
  %1717 = vdwg.mxu0
  %1718 = vmatprep.subr.mxu0 0.0
  %1719 = vmatpush1.msra.mxu0 %v927
  %1720 = vmatprep.subr.mxu0 0.0
  %1721 = vmatpush1.msra.mxu0 %v928
  %1722 = vmatprep.subr.mxu0 0.0
  %1723 = vmatpush1.msra.mxu0 %v929
  %1724 = vmatprep.subr.mxu0 0.0
  %1725 = vmatpush1.msra.mxu0 %v930
  %1726 = vmatprep.subr.mxu0 0.0
  %1727 = vmatpush1.msra.mxu0 %v931
  %1728 = vmatprep.subr.mxu0 0.0
  %1729 = vmatpush1.msra.mxu0 %v932
  %1730 = vmatprep.subr.mxu0 0.0
  %1731 = vmatpush1.msra.mxu0 %v933
  %1732 = vmatprep.subr.mxu0 0.0
  %1733 = vmatpush1.msra.mxu0 %v934
  %1734 = vmatprep.subr.mxu0 0.0
  %1735 = vmatpush1.msra.mxu0 %v935
  %1736 = vmatprep.subr.mxu0 0.0
  %1737 = vmatpush1.msra.mxu0 %v936
  %1738 = vmatprep.subr.mxu0 0.0
  %1739 = vmatpush1.msra.mxu0 %v937
  %1740 = vmatprep.subr.mxu0 0.0
  %1741 = vmatpush1.msra.mxu0 %v938
  %1742 = vmatprep.subr.mxu0 0.0
  %1743 = vmatpush1.msra.mxu0 %v939
  %1744 = vmatprep.subr.mxu0 0.0
  %1745 = vmatpush1.msra.mxu0 %v940
  %1746 = vmatprep.subr.mxu0 0.0
  %1747 = vmatpush1.msra.mxu0 %v941
  %1748 = vmatprep.subr.mxu0 0.0
  %1749 = vmatpush1.msra.mxu0 %v942
  %1750 = vmatprep.subr.mxu0 0.0
  %1751 = vmatpush1.msra.mxu0 0.0
  %1752 = vmatprep.subr.mxu0 0.0
  %1753 = vmatpush1.msra.mxu0 0.0
  %1754 = vmatprep.subr.mxu0 0.0
  %1755 = vmatpush1.msra.mxu0 0.0
  %1756 = vmatprep.subr.mxu0 0.0
  %1757 = vmatpush1.msra.mxu0 0.0
  %1758 = vmatprep.subr.mxu0 0.0
  %1759 = vmatpush1.msra.mxu0 0.0
  %1760 = vmatprep.subr.mxu0 0.0
  %1761 = vmatpush1.msra.mxu0 0.0
  %1762 = vmatprep.subr.mxu0 0.0
  %1763 = vmatpush1.msra.mxu0 0.0
  %1764 = vmatprep.subr.mxu0 0.0
  %1765 = vmatpush1.msra.mxu0 0.0
  %1766 = vmatprep.subr.mxu0 0.0
  %1767 = vmatpush1.msra.mxu0 0.0
  %1768 = vmatprep.subr.mxu0 0.0
  %1769 = vmatpush1.msra.mxu0 0.0
  %1770 = vmatprep.subr.mxu0 0.0
  %1771 = vmatpush1.msra.mxu0 0.0
  %1772 = vmatprep.subr.mxu0 0.0
  %1773 = vmatpush1.msra.mxu0 0.0
  %1774 = vmatprep.subr.mxu0 0.0
  %1775 = vmatpush1.msra.mxu0 0.0
  %1776 = vmatprep.subr.mxu0 0.0
  %1777 = vmatpush1.msra.mxu0 0.0
  %1778 = vmatprep.subr.mxu0 0.0
  %1779 = vmatpush1.msra.mxu0 0.0
  %1780 = vmatprep.subr.mxu0 0.0
  %1781 = vmatpush1.msra.mxu0 0.0
  %1782 = vmatprep.mubr.f32.mxu0 0.0
  %1783 = vmatmul.mubr.f32.gmra.mrb[0].mxu0 %v23
  %v1784 = vpop.f32.mrb[0].mxu0
  %v1785 = vadd.f32 %v1640, %v1784
  %v1786 = vpop.f32.mrb[0].mxu0
  %1787 = vmatprep.mubr.f32.mxu0 0.0
  %1788 = vmatmul.mubr.f32.gmra.mrb[0].mxu0 %v24
  %v1789 = vpop.f32.mrb[0].mxu0
  %v1790 = vadd.f32 %v1645, %v1789
  %v1791 = vpop.f32.mrb[0].mxu0
  %1792 = vmatprep.mubr.f32.mxu0 0.0
  %1793 = vmatmul.mubr.f32.gmra.mrb[0].mxu0 %v25
  %v1794 = vpop.f32.mrb[0].mxu0
  %v1795 = vadd.f32 %v1650, %v1794
  %v1796 = vpop.f32.mrb[0].mxu0
  %1797 = vmatprep.mubr.f32.mxu0 0.0
  %1798 = vmatmul.mubr.f32.gmra.mrb[0].mxu0 %v26
  %v1799 = vpop.f32.mrb[0].mxu0
  %v1800 = vadd.f32 %v1655, %v1799
  %v1801 = vpop.f32.mrb[0].mxu0
  %1802 = vmatprep.mubr.f32.mxu0 0.0
  %1803 = vmatmul.mubr.f32.gmra.mrb[0].mxu0 %v27
  %v1804 = vpop.f32.mrb[0].mxu0
  %v1805 = vadd.f32 %v1660, %v1804
  %v1806 = vpop.f32.mrb[0].mxu0
  %1807 = vmatprep.mubr.f32.mxu0 0.0
  %1808 = vmatmul.mubr.f32.gmra.mrb[0].mxu0 %v28
  %v1809 = vpop.f32.mrb[0].mxu0
  %v1810 = vadd.f32 %v1665, %v1809
  %v1811 = vpop.f32.mrb[0].mxu0
  %1812 = vmatprep.mubr.f32.mxu0 0.0
  %1813 = vmatmul.mubr.f32.gmra.mrb[0].mxu0 %v29
  %v1814 = vpop.f32.mrb[0].mxu0
  %v1815 = vadd.f32 %v1670, %v1814
  %v1816 = vpop.f32.mrb[0].mxu0
  %1817 = vmatprep.mubr.f32.mxu0 0.0
  %1818 = vmatmul.mubr.f32.gmra.mrb[0].mxu0 %v30
  %v1819 = vpop.f32.mrb[0].mxu0
  %v1820 = vadd.f32 %v1675, %v1819
  %v1821 = vpop.f32.mrb[0].mxu0
  %1822 = vmatprep.mubr.f32.mxu0 0.0
  %1823 = vmatmul.mubr.f32.gmra.mrb[0].mxu0 %v31
  %v1824 = vpop.f32.mrb[0].mxu0
  %v1825 = vadd.f32 %v1680, %v1824
  %v1826 = vpop.f32.mrb[0].mxu0
  %1827 = vmatprep.mubr.f32.mxu0 0.0
  %1828 = vmatmul.mubr.f32.gmra.mrb[0].mxu0 %v32
  %v1829 = vpop.f32.mrb[0].mxu0
  %v1830 = vadd.f32 %v1685, %v1829
  %v1831 = vpop.f32.mrb[0].mxu0
  %1832 = vmatprep.mubr.f32.mxu0 0.0
  %1833 = vmatmul.mubr.f32.gmra.mrb[0].mxu0 %v33
  %v1834 = vpop.f32.mrb[0].mxu0
  %v1835 = vadd.f32 %v1690, %v1834
  %v1836 = vpop.f32.mrb[0].mxu0
  %1837 = vmatprep.mubr.f32.mxu0 0.0
  %1838 = vmatmul.mubr.f32.gmra.mrb[0].mxu0 %v34
  %v1839 = vpop.f32.mrb[0].mxu0
  %v1840 = vadd.f32 %v1695, %v1839
  %v1841 = vpop.f32.mrb[0].mxu0
  %1842 = vmatprep.mubr.f32.mxu0 0.0
  %1843 = vmatmul.mubr.f32.gmra.mrb[0].mxu0 %v35
  %v1844 = vpop.f32.mrb[0].mxu0
  %v1845 = vadd.f32 %v1700, %v1844
  %v1846 = vpop.f32.mrb[0].mxu0
  %1847 = vmatprep.mubr.f32.mxu0 0.0
  %1848 = vmatmul.mubr.f32.gmra.mrb[0].mxu0 %v36
  %v1849 = vpop.f32.mrb[0].mxu0
  %v1850 = vadd.f32 %v1705, %v1849
  %v1851 = vpop.f32.mrb[0].mxu0
  %1852 = vmatprep.mubr.f32.mxu0 0.0
  %1853 = vmatmul.mubr.f32.gmra.mrb[0].mxu0 %v37
  %v1854 = vpop.f32.mrb[0].mxu0
  %v1855 = vadd.f32 %v1710, %v1854
  %v1856 = vpop.f32.mrb[0].mxu0
  %1857 = vmatprep.mubr.f32.mxu0 0.0
  %1858 = vmatmul.mubr.f32.gmra.mrb[0].mxu0 %v38
  %v1859 = vpop.f32.mrb[0].mxu0
  %v1860 = vadd.f32 %v1715, %v1859
  %v1861 = vpop.f32.mrb[0].mxu0
  %1862 = vdwg.mxu0
  %1863 = vst [vmem:[%s6] sm:$0xff] %v1785
  %1864 = vst [vmem:[%s6 + $0x8] sm:$0xff] %v1790
  %1865 = vst [vmem:[%s6 + $0x10] sm:$0xff] %v1795
  %1866 = vst [vmem:[%s6 + $0x18] sm:$0xff] %v1800
  %1867 = vst [vmem:[%s6 + $0x20] sm:$0xff] %v1805
  %1868 = vst [vmem:[%s6 + $0x28] sm:$0xff] %v1810
  %1869 = vst [vmem:[%s6 + $0x30] sm:$0xff] %v1815
  %1870 = vst [vmem:[%s6 + $0x38] sm:$0xff] %v1820
  %1871 = vst [vmem:[%s6 + $0x40] sm:$0xff] %v1825
  %1872 = vst [vmem:[%s6 + $0x48] sm:$0xff] %v1830
  %1873 = vst [vmem:[%s6 + $0x50] sm:$0xff] %v1835
  %1874 = vst [vmem:[%s6 + $0x58] sm:$0xff] %v1840
  %1875 = vst [vmem:[%s6 + $0x60] sm:$0xff] %v1845
  %1876 = vst [vmem:[%s6 + $0x68] sm:$0xff] %v1850
  %1877 = vst [vmem:[%s6 + $0x70] sm:$0xff] %v1855
  %1878 = vst [vmem:[%s6 + $0x78] sm:$0xff] %v1860
  // Predicated region
  $region26: #{gcn_forward.1} parent=0 // pred_check
    _
  $region27: #{gcn_forward.1} parent=0 // pred_check_branch
    %1880 = sbr.rel (0) target = $region29
  $region28: #{gcn_forward.1} parent=0 // pred_region
    _
  $region29: #{gcn_forward.1} parent=0 // pred_fallthru
    _
  // Predicated region
  $region30: #{gcn_forward.1} parent=0 // pred_check
    _
  $region31: #{gcn_forward.1} parent=0 // pred_check_branch
    %1882 = sbr.rel (0) target = $region33
  $region32: #{gcn_forward.1} parent=0 // pred_region
    _
  $region33: #{gcn_forward.1} parent=0 // pred_fallthru
    _

</llo_original>
